<compile_context>
chip_gen: v7x
topology: tpu7x:2x2x1
jax: 0.10.0
libtpu: 0.0.40
codegen_flags: <defaults>
</compile_context>

<pallas_src>
import functools

import numpy as np

import jax
import jax.numpy as jnp
from jax.experimental import pallas as pl
from jax.experimental.pallas import tpu as pltpu


# ----------------------------------------------------------------------------
# Fused forward kernel: one grid step == B_TILE images, everything in vregs.
# ----------------------------------------------------------------------------
def _food_fwd_kernel(
    x_ref,     # (B_TILE*H, W*C0)            images stacked along sublanes
    m3a_ref,   # (3, W*C0,  Wo1*CH)           block1 3x3 conv: one banded matrix per kh
    b1a_ref,   # (1, Wo1*CH)
    m1b_ref,   # (Wo1*CH, Wo1*CH)             block1 1x1 conv (block-diagonal)
    b1b_ref,   # (1, Wo1*CH)
    sr1_ref,   # (2, B_TILE*Hp1, B_TILE*H-2)  pool1 even/odd row selectors (image-major)
    sc1_ref,   # (2, Wo1*CH, Wp1*CH)          pool1 even/odd col selectors
    m3b_ref,   # (3, Wp1*CH, Wo2*CH)          block2 3x3 conv
    b2a_ref,   # (1, Wo2*CH)
    m2b_ref,   # (Wo2*CH, Wo2*CH)             block2 1x1 conv
    b2b_ref,   # (1, Wo2*CH)
    sr2_ref,   # (2, Hp2*PITCH, B_TILE*Hp1-2) pool2 row selectors (h-major, 8-row pitch)
    sc2_ref,   # (2, Wo2*CH, Wp2*CH)
    g_ref,     # (Hp2, Wp2*CH, OUT)           classifier with NCHW flatten baked in
    fcb_ref,   # (1, OUT)
    out_ref,   # (1, B_TILE, OUT)
):
    dot = functools.partial(jnp.dot, preferred_element_type=jnp.float32)
    relu = lambda t: jnp.maximum(t, 0.0)

    # ------------- conv block 1 (all B_TILE images stacked on sublanes) -----
    r1 = x_ref.shape[0] - 2                  # valid 3x3 window starts (stacked)
    acc = dot(x_ref[0:r1, :], m3a_ref[0])    # im2col folded into m3a bands
    acc = acc + dot(x_ref[1:1 + r1, :], m3a_ref[1])
    acc = acc + dot(x_ref[2:2 + r1, :], m3a_ref[2])
    y = relu(acc + b1a_ref[...])                            # 3x3 conv + ReLU
    y = relu(dot(y, m1b_ref[...]) + b1b_ref[...])           # 1x1 conv + ReLU
    # 2x2 max-pool (floor): exact 0/1 row/col selections + elementwise max.
    # Junk rows (windows straddling image boundaries) are simply never selected.
    zr = jnp.maximum(dot(sr1_ref[0], y), dot(sr1_ref[1], y))    # (B*Hp1, Wo1*CH)
    p1 = jnp.maximum(dot(zr, sc1_ref[0]), dot(zr, sc1_ref[1]))  # (B*Hp1, Wp1*CH)

    # ----------------------------- conv block 2 -----------------------------
    r2 = p1.shape[0] - 2
    acc2 = dot(p1[0:r2, :], m3b_ref[0])
    acc2 = acc2 + dot(p1[1:1 + r2, :], m3b_ref[1])
    acc2 = acc2 + dot(p1[2:2 + r2, :], m3b_ref[2])
    y2 = relu(acc2 + b2a_ref[...])
    y2 = relu(dot(y2, m2b_ref[...]) + b2b_ref[...])
    zr2 = jnp.maximum(dot(sr2_ref[0], y2), dot(sr2_ref[1], y2))   # h-major rows
    p2 = jnp.maximum(dot(zr2, sc2_ref[0]), dot(zr2, sc2_ref[1]))  # (Hp2*PITCH, Wp2*CH)

    # ---------------- classifier (NCHW flatten baked into g) ----------------
    bt = out_ref.shape[1]
    hp2 = g_ref.shape[0]
    pitch = p2.shape[0] // hp2               # sublane-aligned per-h row pitch
    logits = fcb_ref[...]
    for h in range(hp2):                     # Hp2 == 2 batched dots, all images
        logits = logits + dot(p2[h * pitch:h * pitch + bt, :], g_ref[h])
    out_ref[0] = logits                      # one (B_TILE, OUT) store per step


# ----------------------------------------------------------------------------
# Forward wrapper
# ----------------------------------------------------------------------------
@functools.partial(jax.jit, static_argnames=("b_tile",))
def food_model_forward(x_nchw, packed, *, b_tile):
    """x_nchw: (N, C, H, W) float32; packed: tuple from pack_params(..., b_tile)."""
    N, C, H, W = x_nchw.shape
    out_dim = packed[-1].shape[-1]
    assert (b_tile * H) % 8 == 0, "tile row count must be sublane-aligned"

    n_pad = (-N) % b_tile
    if n_pad:
        x_nchw = jnp.pad(x_nchw, ((0, n_pad), (0, 0), (0, 0), (0, 0)))
    n_total = N + n_pad
    n_steps = n_total // b_tile

    # Glue: NCHW -> stacked 2-D (rows = image-major h, lanes = w*C + c).
    x2d = jnp.transpose(x_nchw, (0, 2, 3, 1)).reshape(n_total * H, W * C)

    x_spec = pl.BlockSpec((b_tile * H, W * C), lambda b: (b, 0))
    w_specs = [pl.BlockSpec(w.shape, lambda b, nd=w.ndim: (0,) * nd)
               for w in packed]

    out = pl.pallas_call(
        _food_fwd_kernel,
        out_shape=jax.ShapeDtypeStruct((n_steps, b_tile, out_dim), jnp.float32),
        grid=(n_steps,),
        in_specs=[x_spec] + w_specs,
        out_specs=pl.BlockSpec((1, b_tile, out_dim), lambda b: (b, 0, 0)),
        compiler_params=pltpu.CompilerParams(
            dimension_semantics=("parallel",)),
    )(x2d, *packed)
    return out.reshape(n_total, out_dim)[:N]


# ----------------------------------------------------------------------------
# One-time (init-time) weight repacking into matmul-ready constants.
# ----------------------------------------------------------------------------
def pack_params(params, hw, b_tile):
    f = lambda a: np.asarray(a, dtype=np.float32)
    w1a, b1a = f(params["c1a_w"]), f(params["c1a_b"])
    w1b, b1b = f(params["c1b_w"]), f(params["c1b_b"])
    w2a, b2a = f(params["c2a_w"]), f(params["c2a_b"])
    w2b, b2b = f(params["c2b_w"]), f(params["c2b_b"])
    fcw, fcb = f(params["fc_w"]), f(params["fc_b"])

    ch = w1a.shape[0]
    h0 = hw            # input spatial size (square)
    ho1 = h0 - 2       # after 3x3 VALID conv
    hp1 = ho1 // 2     # after 2x2 max-pool (floor)
    ho2 = hp1 - 2
    hp2 = ho2 // 2
    assert fcw.shape[1] == ch * hp2 * hp2, "classifier in_features mismatch"

    pitch2 = ((b_tile + 7) // 8) * 8   # sublane-aligned per-h pitch for pool 2

    def banded3x3(w_oihw, w_in, w_out):
        """(3, w_in*Cin, w_out*Cout): per-kh banded conv matrix (kw, ci folded)."""
        co, ci = w_oihw.shape[0], w_oihw.shape[1]
        m = np.zeros((3, w_in * ci, w_out * co), np.float32)
        for kh in range(3):
            for w in range(w_out):
                for kw in range(3):
                    m[kh, (w + kw) * ci:(w + kw + 1) * ci,
                      w * co:(w + 1) * co] = w_oihw[:, :, kh, kw].T
        return m

    def blockdiag1x1(w_oihw, width):
        co, ci = w_oihw.shape[0], w_oihw.shape[1]
        m = np.zeros((width * ci, width * co), np.float32)
        for w in range(width):
            m[w * ci:(w + 1) * ci, w * co:(w + 1) * co] = w_oihw[:, :, 0, 0].T
        return m

    def pool_row_sel_img_major(h_img, h_out, rows_in):
        """Output row b*h_out + i  <-  input row b*h_img + 2i (+t)."""
        s = np.zeros((2, b_tile * h_out, rows_in), np.float32)
        for b in range(b_tile):
            for i in range(h_out):
                s[0, b * h_out + i, b * h_img + 2 * i] = 1.0
                s[1, b * h_out + i, b * h_img + 2 * i + 1] = 1.0
        return s

    def pool_row_sel_h_major(h_img, h_out, rows_in, pitch):
        """Output row h*pitch + b  <-  input row b*h_img + 2h (+t)."""
        s = np.zeros((2, h_out * pitch, rows_in), np.float32)
        for h in range(h_out):
            for b in range(b_tile):
                s[0, h * pitch + b, b * h_img + 2 * h] = 1.0
                s[1, h * pitch + b, b * h_img + 2 * h + 1] = 1.0
        return s

    def pool_col_sel(w_in, w_out, c):
        s = np.zeros((2, w_in * c, w_out * c), np.float32)
        eye = np.eye(c, dtype=np.float32)
        for j in range(w_out):
            s[0, (2 * j) * c:(2 * j + 1) * c, j * c:(j + 1) * c] = eye
            s[1, (2 * j + 1) * c:(2 * j + 2) * c, j * c:(j + 1) * c] = eye
        return s

    def classifier_mats(fc_w, hp, wp, c):
        g = np.zeros((hp, wp * c, fc_w.shape[0]), np.float32)
        for h in range(hp):
            for w in range(wp):
                for cc in range(c):
                    # PyTorch nn.Flatten order on (N, C, Hp, Wp)
                    g[h, w * c + cc, :] = fc_w[:, cc * hp * wp + h * wp + w]
        return g

    packed = (
        banded3x3(w1a, h0, ho1),                                   # 0
        np.tile(b1a, ho1)[None, :],                                # 1
        blockdiag1x1(w1b, ho1),                                    # 2
        np.tile(b1b, ho1)[None, :],                                # 3
        pool_row_sel_img_major(h0, hp1, b_tile * h0 - 2),          # 4
        pool_col_sel(ho1, hp1, ch),                                # 5
        banded3x3(w2a, hp1, ho2),                                  # 6
        np.tile(b2a, ho2)[None, :],                                # 7
        blockdiag1x1(w2b, ho2),                                    # 8
        np.tile(b2b, ho2)[None, :],                                # 9
        pool_row_sel_h_major(hp1, hp2, b_tile * hp1 - 2, pitch2),  # 10
        pool_col_sel(ho2, hp2, ch),                                # 11
        classifier_mats(fcw, hp2, hp2, ch),                        # 12
        fcb[None, :],                                              # 13
    )
    return tuple(jnp.asarray(a) for a in packed)


# ----------------------------------------------------------------------------
# Deterministic parameter init (PyTorch-default-style uniform(-k, k))
# ----------------------------------------------------------------------------
def init_params(key, in_channels, hidden_units, output_shape, in_feat):
    def uni(k, shape, fan_in):
        bound = 1.0 / jnp.sqrt(jnp.float32(fan_in))
        return jax.random.uniform(k, shape, jnp.float32, -bound, bound)

    ks = jax.random.split(key, 10)
    return {
        "c1a_w": uni(ks[0], (hidden_units, in_channels, 3, 3), in_channels * 9),
        "c1a_b": uni(ks[1], (hidden_units,), in_channels * 9),
        "c1b_w": uni(ks[2], (hidden_units, hidden_units, 1, 1), hidden_units),
        "c1b_b": uni(ks[3], (hidden_units,), hidden_units),
        "c2a_w": uni(ks[4], (hidden_units, hidden_units, 3, 3), hidden_units * 9),
        "c2a_b": uni(ks[5], (hidden_units,), hidden_units * 9),
        "c2b_w": uni(ks[6], (hidden_units, hidden_units, 1, 1), hidden_units),
        "c2b_b": uni(ks[7], (hidden_units,), hidden_units),
        "fc_w": uni(ks[8], (output_shape, in_feat), in_feat),
        "fc_b": uni(ks[9], (output_shape,), in_feat),
    }


# ----------------------------------------------------------------------------
# Pure-JAX reference (lax.conv / reduce_window) for verification
# ----------------------------------------------------------------------------
def ref_forward(x, p):
    relu = lambda t: jnp.maximum(t, 0.0)

    def conv(x, w, b):
        y = jax.lax.conv_general_dilated(
            x, w, window_strides=(1, 1), padding="VALID",
            dimension_numbers=("NCHW", "OIHW", "NCHW"))
        return y + b[None, :, None, None]

    def pool(x):
        return jax.lax.reduce_window(
            x, -jnp.inf, jax.lax.max,
            window_dimensions=(1, 1, 2, 2), window_strides=(1, 1, 2, 2),
            padding="VALID")

    x = pool(relu(conv(relu(conv(x, p["c1a_w"], p["c1a_b"])), p["c1b_w"], p["c1b_b"])))
    x = pool(relu(conv(relu(conv(x, p["c2a_w"], p["c2a_b"])), p["c2b_w"], p["c2b_b"])))
    x = x.reshape(x.shape[0], -1)
    return x @ p["fc_w"].T + p["fc_b"]


# ----------------------------------------------------------------------------
if __name__ == "__main__":
    # 8 RGB 16x16 images, hidden_units=10, 3 classes, 4 images per grid step.
    # Spatial trace (as the PyTorch module does with sample_X):
    # 16 -3x3-> 14 -1x1-> 14 -pool-> 7 -3x3-> 5 -1x1-> 5 -pool-> 2
    BATCH, IN_CH, HW, HIDDEN, OUT = 8, 3, 16, 10, 3
    B_TILE = 4                     # images per grid step (grid = BATCH // B_TILE)
    in_feat = HIDDEN * 2 * 2       # = 40

    key = jax.random.PRNGKey(0)
    kx, kp = jax.random.split(key)
    x = jax.random.normal(kx, (BATCH, IN_CH, HW, HW), jnp.float32)  # NCHW
    params = init_params(kp, IN_CH, HIDDEN, OUT, in_feat)
    packed = pack_params(params, hw=HW, b_tile=B_TILE)   # one-time weight repack

    out = jax.block_until_ready(food_model_forward(x, packed, b_tile=B_TILE))
    assert out.shape == (BATCH, OUT), out.shape

    ref = jax.block_until_ready(ref_forward(x, params))
    err = float(jnp.max(jnp.abs(out - ref)))
    assert jnp.allclose(out, ref, atol=1e-3, rtol=1e-3), f"mismatch: max abs err {err}"

    print("KERNEL_OK")
</pallas_src>

<mosaic_0001>
module attributes {stable_mosaic.version = 11 : i64} {
  func.func @_food_fwd_kernel(%arg0: i32, %arg1: memref<64x48xf32, #tpu.memory_space<vmem>>, %arg2: memref<3x48x140xf32, #tpu.memory_space<vmem>>, %arg3: memref<1x140xf32, #tpu.memory_space<vmem>>, %arg4: memref<140x140xf32, #tpu.memory_space<vmem>>, %arg5: memref<1x140xf32, #tpu.memory_space<vmem>>, %arg6: memref<2x28x62xf32, #tpu.memory_space<vmem>>, %arg7: memref<2x140x70xf32, #tpu.memory_space<vmem>>, %arg8: memref<3x70x50xf32, #tpu.memory_space<vmem>>, %arg9: memref<1x50xf32, #tpu.memory_space<vmem>>, %arg10: memref<50x50xf32, #tpu.memory_space<vmem>>, %arg11: memref<1x50xf32, #tpu.memory_space<vmem>>, %arg12: memref<2x16x26xf32, #tpu.memory_space<vmem>>, %arg13: memref<2x50x20xf32, #tpu.memory_space<vmem>>, %arg14: memref<2x20x3xf32, #tpu.memory_space<vmem>>, %arg15: memref<1x3xf32, #tpu.memory_space<vmem>>, %arg16: memref<1x4x3xf32, #tpu.memory_space<vmem>>) attributes {dimension_semantics = [#tpu.dimension_semantics<parallel>], iteration_bounds = array<i64: 2>, scalar_prefetch = 0 : i64, scratch_operands = 0 : i64, tpu.core_type = #tpu.core_type<tc>, window_params = [{transform_indices = @transform_0, window_bounds = array<i64: 64, 48>}, {pipeline_mode = #tpu.pipeline_mode<synchronous>, transform_indices = @transform_1, window_bounds = array<i64: 3, 48, 140>}, {pipeline_mode = #tpu.pipeline_mode<synchronous>, transform_indices = @transform_2, window_bounds = array<i64: 1, 140>}, {pipeline_mode = #tpu.pipeline_mode<synchronous>, transform_indices = @transform_3, window_bounds = array<i64: 140, 140>}, {pipeline_mode = #tpu.pipeline_mode<synchronous>, transform_indices = @transform_4, window_bounds = array<i64: 1, 140>}, {pipeline_mode = #tpu.pipeline_mode<synchronous>, transform_indices = @transform_5, window_bounds = array<i64: 2, 28, 62>}, {pipeline_mode = #tpu.pipeline_mode<synchronous>, transform_indices = @transform_6, window_bounds = array<i64: 2, 140, 70>}, {pipeline_mode = #tpu.pipeline_mode<synchronous>, transform_indices = @transform_7, window_bounds = array<i64: 3, 70, 50>}, {pipeline_mode = #tpu.pipeline_mode<synchronous>, transform_indices = @transform_8, window_bounds = array<i64: 1, 50>}, {pipeline_mode = #tpu.pipeline_mode<synchronous>, transform_indices = @transform_9, window_bounds = array<i64: 50, 50>}, {pipeline_mode = #tpu.pipeline_mode<synchronous>, transform_indices = @transform_10, window_bounds = array<i64: 1, 50>}, {pipeline_mode = #tpu.pipeline_mode<synchronous>, transform_indices = @transform_11, window_bounds = array<i64: 2, 16, 26>}, {pipeline_mode = #tpu.pipeline_mode<synchronous>, transform_indices = @transform_12, window_bounds = array<i64: 2, 50, 20>}, {pipeline_mode = #tpu.pipeline_mode<synchronous>, transform_indices = @transform_13, window_bounds = array<i64: 2, 20, 3>}, {pipeline_mode = #tpu.pipeline_mode<synchronous>, transform_indices = @transform_14, window_bounds = array<i64: 1, 3>}, {transform_indices = @transform_15, window_bounds = array<i64: 1, 4, 3>}]} {
    %c0 = arith.constant 0 : index
    %c0_0 = arith.constant 0 : index
    %0 = vector.load %arg1[%c0, %c0_0] : memref<64x48xf32, #tpu.memory_space<vmem>>, vector<62x48xf32>
    %c0_1 = arith.constant 0 : index
    %c0_2 = arith.constant 0 : index
    %c0_3 = arith.constant 0 : index
    %1 = vector.load %arg2[%c0_1, %c0_2, %c0_3] : memref<3x48x140xf32, #tpu.memory_space<vmem>>, vector<1x48x140xf32>
    %2 = vector.shape_cast %1 : vector<1x48x140xf32> to vector<48x140xf32>
    %cst = arith.constant dense<0.000000e+00> : vector<62x140xf32>
    %3 = tpu.matmul %0, %2, %cst {dimension_numbers = #tpu.dot_dimension_numbers<[1], [0], [0], [1], [0, 0, 1, 1], [], []>} : vector<62x48xf32>, vector<48x140xf32>, vector<62x140xf32> -> vector<62x140xf32>
    %c1 = arith.constant 1 : index
    %c0_4 = arith.constant 0 : index
    %4 = vector.load %arg1[%c1, %c0_4] : memref<64x48xf32, #tpu.memory_space<vmem>>, vector<62x48xf32>
    %c1_5 = arith.constant 1 : index
    %c0_6 = arith.constant 0 : index
    %c0_7 = arith.constant 0 : index
    %5 = vector.load %arg2[%c1_5, %c0_6, %c0_7] : memref<3x48x140xf32, #tpu.memory_space<vmem>>, vector<1x48x140xf32>
    %6 = vector.shape_cast %5 : vector<1x48x140xf32> to vector<48x140xf32>
    %cst_8 = arith.constant dense<0.000000e+00> : vector<62x140xf32>
    %7 = tpu.matmul %4, %6, %cst_8 {dimension_numbers = #tpu.dot_dimension_numbers<[1], [0], [0], [1], [0, 0, 1, 1], [], []>} : vector<62x48xf32>, vector<48x140xf32>, vector<62x140xf32> -> vector<62x140xf32>
    %8 = arith.addf %3, %7 : vector<62x140xf32>
    %c2 = arith.constant 2 : index
    %c0_9 = arith.constant 0 : index
    %9 = vector.load %arg1[%c2, %c0_9] : memref<64x48xf32, #tpu.memory_space<vmem>>, vector<62x48xf32>
    %c2_10 = arith.constant 2 : index
    %c0_11 = arith.constant 0 : index
    %c0_12 = arith.constant 0 : index
    %10 = vector.load %arg2[%c2_10, %c0_11, %c0_12] : memref<3x48x140xf32, #tpu.memory_space<vmem>>, vector<1x48x140xf32>
    %11 = vector.shape_cast %10 : vector<1x48x140xf32> to vector<48x140xf32>
    %cst_13 = arith.constant dense<0.000000e+00> : vector<62x140xf32>
    %12 = tpu.matmul %9, %11, %cst_13 {dimension_numbers = #tpu.dot_dimension_numbers<[1], [0], [0], [1], [0, 0, 1, 1], [], []>} : vector<62x48xf32>, vector<48x140xf32>, vector<62x140xf32> -> vector<62x140xf32>
    %13 = arith.addf %8, %12 : vector<62x140xf32>
    %c0_14 = arith.constant 0 : index
    %c0_15 = arith.constant 0 : index
    %14 = vector.load %arg3[%c0_14, %c0_15] : memref<1x140xf32, #tpu.memory_space<vmem>>, vector<1x140xf32>
    %15 = vector.broadcast %14 : vector<1x140xf32> to vector<62x140xf32>
    %16 = arith.addf %13, %15 : vector<62x140xf32>
    %cst_16 = arith.constant 0.000000e+00 : f32
    %17 = vector.broadcast %cst_16 : f32 to vector<62x140xf32>
    %18 = arith.maximumf %16, %17 : vector<62x140xf32>
    %c0_17 = arith.constant 0 : index
    %c0_18 = arith.constant 0 : index
    %19 = vector.load %arg4[%c0_17, %c0_18] : memref<140x140xf32, #tpu.memory_space<vmem>>, vector<140x140xf32>
    %cst_19 = arith.constant dense<0.000000e+00> : vector<62x140xf32>
    %20 = tpu.matmul %18, %19, %cst_19 {dimension_numbers = #tpu.dot_dimension_numbers<[1], [0], [0], [1], [0, 0, 1, 1], [], []>} : vector<62x140xf32>, vector<140x140xf32>, vector<62x140xf32> -> vector<62x140xf32>
    %c0_20 = arith.constant 0 : index
    %c0_21 = arith.constant 0 : index
    %21 = vector.load %arg5[%c0_20, %c0_21] : memref<1x140xf32, #tpu.memory_space<vmem>>, vector<1x140xf32>
    %22 = vector.broadcast %21 : vector<1x140xf32> to vector<62x140xf32>
    %23 = arith.addf %20, %22 : vector<62x140xf32>
    %cst_22 = arith.constant 0.000000e+00 : f32
    %24 = vector.broadcast %cst_22 : f32 to vector<62x140xf32>
    %25 = arith.maximumf %23, %24 : vector<62x140xf32>
    %c0_23 = arith.constant 0 : index
    %c0_24 = arith.constant 0 : index
    %c0_25 = arith.constant 0 : index
    %26 = vector.load %arg6[%c0_23, %c0_24, %c0_25] : memref<2x28x62xf32, #tpu.memory_space<vmem>>, vector<1x28x62xf32>
    %27 = vector.shape_cast %26 : vector<1x28x62xf32> to vector<28x62xf32>
    %cst_26 = arith.constant dense<0.000000e+00> : vector<28x140xf32>
    %28 = tpu.matmul %27, %25, %cst_26 {dimension_numbers = #tpu.dot_dimension_numbers<[1], [0], [0], [1], [0, 0, 1, 1], [], []>} : vector<28x62xf32>, vector<62x140xf32>, vector<28x140xf32> -> vector<28x140xf32>
    %c1_27 = arith.constant 1 : index
    %c0_28 = arith.constant 0 : index
    %c0_29 = arith.constant 0 : index
    %29 = vector.load %arg6[%c1_27, %c0_28, %c0_29] : memref<2x28x62xf32, #tpu.memory_space<vmem>>, vector<1x28x62xf32>
    %30 = vector.shape_cast %29 : vector<1x28x62xf32> to vector<28x62xf32>
    %cst_30 = arith.constant dense<0.000000e+00> : vector<28x140xf32>
    %31 = tpu.matmul %30, %25, %cst_30 {dimension_numbers = #tpu.dot_dimension_numbers<[1], [0], [0], [1], [0, 0, 1, 1], [], []>} : vector<28x62xf32>, vector<62x140xf32>, vector<28x140xf32> -> vector<28x140xf32>
    %32 = arith.maximumf %28, %31 : vector<28x140xf32>
    %c0_31 = arith.constant 0 : index
    %c0_32 = arith.constant 0 : index
    %c0_33 = arith.constant 0 : index
    %33 = vector.load %arg7[%c0_31, %c0_32, %c0_33] : memref<2x140x70xf32, #tpu.memory_space<vmem>>, vector<1x140x70xf32>
    %34 = vector.shape_cast %33 : vector<1x140x70xf32> to vector<140x70xf32>
    %cst_34 = arith.constant dense<0.000000e+00> : vector<28x70xf32>
    %35 = tpu.matmul %32, %34, %cst_34 {dimension_numbers = #tpu.dot_dimension_numbers<[1], [0], [0], [1], [0, 0, 1, 1], [], []>} : vector<28x140xf32>, vector<140x70xf32>, vector<28x70xf32> -> vector<28x70xf32>
    %c1_35 = arith.constant 1 : index
    %c0_36 = arith.constant 0 : index
    %c0_37 = arith.constant 0 : index
    %36 = vector.load %arg7[%c1_35, %c0_36, %c0_37] : memref<2x140x70xf32, #tpu.memory_space<vmem>>, vector<1x140x70xf32>
    %37 = vector.shape_cast %36 : vector<1x140x70xf32> to vector<140x70xf32>
    %cst_38 = arith.constant dense<0.000000e+00> : vector<28x70xf32>
    %38 = tpu.matmul %32, %37, %cst_38 {dimension_numbers = #tpu.dot_dimension_numbers<[1], [0], [0], [1], [0, 0, 1, 1], [], []>} : vector<28x140xf32>, vector<140x70xf32>, vector<28x70xf32> -> vector<28x70xf32>
    %39 = arith.maximumf %35, %38 : vector<28x70xf32>
    %40 = vector.extract_strided_slice %39 {offsets = [0, 0], sizes = [26, 70], strides = [1, 1]} : vector<28x70xf32> to vector<26x70xf32>
    %c0_39 = arith.constant 0 : index
    %c0_40 = arith.constant 0 : index
    %c0_41 = arith.constant 0 : index
    %41 = vector.load %arg8[%c0_39, %c0_40, %c0_41] : memref<3x70x50xf32, #tpu.memory_space<vmem>>, vector<1x70x50xf32>
    %42 = vector.shape_cast %41 : vector<1x70x50xf32> to vector<70x50xf32>
    %cst_42 = arith.constant dense<0.000000e+00> : vector<26x50xf32>
    %43 = tpu.matmul %40, %42, %cst_42 {dimension_numbers = #tpu.dot_dimension_numbers<[1], [0], [0], [1], [0, 0, 1, 1], [], []>} : vector<26x70xf32>, vector<70x50xf32>, vector<26x50xf32> -> vector<26x50xf32>
    %44 = vector.extract_strided_slice %39 {offsets = [1, 0], sizes = [26, 70], strides = [1, 1]} : vector<28x70xf32> to vector<26x70xf32>
    %c1_43 = arith.constant 1 : index
    %c0_44 = arith.constant 0 : index
    %c0_45 = arith.constant 0 : index
    %45 = vector.load %arg8[%c1_43, %c0_44, %c0_45] : memref<3x70x50xf32, #tpu.memory_space<vmem>>, vector<1x70x50xf32>
    %46 = vector.shape_cast %45 : vector<1x70x50xf32> to vector<70x50xf32>
    %cst_46 = arith.constant dense<0.000000e+00> : vector<26x50xf32>
    %47 = tpu.matmul %44, %46, %cst_46 {dimension_numbers = #tpu.dot_dimension_numbers<[1], [0], [0], [1], [0, 0, 1, 1], [], []>} : vector<26x70xf32>, vector<70x50xf32>, vector<26x50xf32> -> vector<26x50xf32>
    %48 = arith.addf %43, %47 : vector<26x50xf32>
    %49 = vector.extract_strided_slice %39 {offsets = [2, 0], sizes = [26, 70], strides = [1, 1]} : vector<28x70xf32> to vector<26x70xf32>
    %c2_47 = arith.constant 2 : index
    %c0_48 = arith.constant 0 : index
    %c0_49 = arith.constant 0 : index
    %50 = vector.load %arg8[%c2_47, %c0_48, %c0_49] : memref<3x70x50xf32, #tpu.memory_space<vmem>>, vector<1x70x50xf32>
    %51 = vector.shape_cast %50 : vector<1x70x50xf32> to vector<70x50xf32>
    %cst_50 = arith.constant dense<0.000000e+00> : vector<26x50xf32>
    %52 = tpu.matmul %49, %51, %cst_50 {dimension_numbers = #tpu.dot_dimension_numbers<[1], [0], [0], [1], [0, 0, 1, 1], [], []>} : vector<26x70xf32>, vector<70x50xf32>, vector<26x50xf32> -> vector<26x50xf32>
    %53 = arith.addf %48, %52 : vector<26x50xf32>
    %c0_51 = arith.constant 0 : index
    %c0_52 = arith.constant 0 : index
    %54 = vector.load %arg9[%c0_51, %c0_52] : memref<1x50xf32, #tpu.memory_space<vmem>>, vector<1x50xf32>
    %55 = vector.broadcast %54 : vector<1x50xf32> to vector<26x50xf32>
    %56 = arith.addf %53, %55 : vector<26x50xf32>
    %cst_53 = arith.constant 0.000000e+00 : f32
    %57 = vector.broadcast %cst_53 : f32 to vector<26x50xf32>
    %58 = arith.maximumf %56, %57 : vector<26x50xf32>
    %c0_54 = arith.constant 0 : index
    %c0_55 = arith.constant 0 : index
    %59 = vector.load %arg10[%c0_54, %c0_55] : memref<50x50xf32, #tpu.memory_space<vmem>>, vector<50x50xf32>
    %cst_56 = arith.constant dense<0.000000e+00> : vector<26x50xf32>
    %60 = tpu.matmul %58, %59, %cst_56 {dimension_numbers = #tpu.dot_dimension_numbers<[1], [0], [0], [1], [0, 0, 1, 1], [], []>} : vector<26x50xf32>, vector<50x50xf32>, vector<26x50xf32> -> vector<26x50xf32>
    %c0_57 = arith.constant 0 : index
    %c0_58 = arith.constant 0 : index
    %61 = vector.load %arg11[%c0_57, %c0_58] : memref<1x50xf32, #tpu.memory_space<vmem>>, vector<1x50xf32>
    %62 = vector.broadcast %61 : vector<1x50xf32> to vector<26x50xf32>
    %63 = arith.addf %60, %62 : vector<26x50xf32>
    %cst_59 = arith.constant 0.000000e+00 : f32
    %64 = vector.broadcast %cst_59 : f32 to vector<26x50xf32>
    %65 = arith.maximumf %63, %64 : vector<26x50xf32>
    %c0_60 = arith.constant 0 : index
    %c0_61 = arith.constant 0 : index
    %c0_62 = arith.constant 0 : index
    %66 = vector.load %arg12[%c0_60, %c0_61, %c0_62] : memref<2x16x26xf32, #tpu.memory_space<vmem>>, vector<1x16x26xf32>
    %67 = vector.shape_cast %66 : vector<1x16x26xf32> to vector<16x26xf32>
    %cst_63 = arith.constant dense<0.000000e+00> : vector<16x50xf32>
    %68 = tpu.matmul %67, %65, %cst_63 {dimension_numbers = #tpu.dot_dimension_numbers<[1], [0], [0], [1], [0, 0, 1, 1], [], []>} : vector<16x26xf32>, vector<26x50xf32>, vector<16x50xf32> -> vector<16x50xf32>
    %c1_64 = arith.constant 1 : index
    %c0_65 = arith.constant 0 : index
    %c0_66 = arith.constant 0 : index
    %69 = vector.load %arg12[%c1_64, %c0_65, %c0_66] : memref<2x16x26xf32, #tpu.memory_space<vmem>>, vector<1x16x26xf32>
    %70 = vector.shape_cast %69 : vector<1x16x26xf32> to vector<16x26xf32>
    %cst_67 = arith.constant dense<0.000000e+00> : vector<16x50xf32>
    %71 = tpu.matmul %70, %65, %cst_67 {dimension_numbers = #tpu.dot_dimension_numbers<[1], [0], [0], [1], [0, 0, 1, 1], [], []>} : vector<16x26xf32>, vector<26x50xf32>, vector<16x50xf32> -> vector<16x50xf32>
    %72 = arith.maximumf %68, %71 : vector<16x50xf32>
    %c0_68 = arith.constant 0 : index
    %c0_69 = arith.constant 0 : index
    %c0_70 = arith.constant 0 : index
    %73 = vector.load %arg13[%c0_68, %c0_69, %c0_70] : memref<2x50x20xf32, #tpu.memory_space<vmem>>, vector<1x50x20xf32>
    %74 = vector.shape_cast %73 : vector<1x50x20xf32> to vector<50x20xf32>
    %cst_71 = arith.constant dense<0.000000e+00> : vector<16x20xf32>
    %75 = tpu.matmul %72, %74, %cst_71 {dimension_numbers = #tpu.dot_dimension_numbers<[1], [0], [0], [1], [0, 0, 1, 1], [], []>} : vector<16x50xf32>, vector<50x20xf32>, vector<16x20xf32> -> vector<16x20xf32>
    %c1_72 = arith.constant 1 : index
    %c0_73 = arith.constant 0 : index
    %c0_74 = arith.constant 0 : index
    %76 = vector.load %arg13[%c1_72, %c0_73, %c0_74] : memref<2x50x20xf32, #tpu.memory_space<vmem>>, vector<1x50x20xf32>
    %77 = vector.shape_cast %76 : vector<1x50x20xf32> to vector<50x20xf32>
    %cst_75 = arith.constant dense<0.000000e+00> : vector<16x20xf32>
    %78 = tpu.matmul %72, %77, %cst_75 {dimension_numbers = #tpu.dot_dimension_numbers<[1], [0], [0], [1], [0, 0, 1, 1], [], []>} : vector<16x50xf32>, vector<50x20xf32>, vector<16x20xf32> -> vector<16x20xf32>
    %79 = arith.maximumf %75, %78 : vector<16x20xf32>
    %c0_76 = arith.constant 0 : index
    %c0_77 = arith.constant 0 : index
    %80 = vector.load %arg15[%c0_76, %c0_77] : memref<1x3xf32, #tpu.memory_space<vmem>>, vector<1x3xf32>
    %81 = vector.extract_strided_slice %79 {offsets = [0, 0], sizes = [4, 20], strides = [1, 1]} : vector<16x20xf32> to vector<4x20xf32>
    %c0_78 = arith.constant 0 : index
    %c0_79 = arith.constant 0 : index
    %c0_80 = arith.constant 0 : index
    %82 = vector.load %arg14[%c0_78, %c0_79, %c0_80] : memref<2x20x3xf32, #tpu.memory_space<vmem>>, vector<1x20x3xf32>
    %83 = vector.shape_cast %82 : vector<1x20x3xf32> to vector<20x3xf32>
    %cst_81 = arith.constant dense<0.000000e+00> : vector<4x3xf32>
    %84 = tpu.matmul %81, %83, %cst_81 {dimension_numbers = #tpu.dot_dimension_numbers<[1], [0], [0], [1], [0, 0, 1, 1], [], []>} : vector<4x20xf32>, vector<20x3xf32>, vector<4x3xf32> -> vector<4x3xf32>
    %85 = vector.broadcast %80 : vector<1x3xf32> to vector<4x3xf32>
    %86 = arith.addf %85, %84 : vector<4x3xf32>
    %87 = vector.extract_strided_slice %79 {offsets = [8, 0], sizes = [4, 20], strides = [1, 1]} : vector<16x20xf32> to vector<4x20xf32>
    %c1_82 = arith.constant 1 : index
    %c0_83 = arith.constant 0 : index
    %c0_84 = arith.constant 0 : index
    %88 = vector.load %arg14[%c1_82, %c0_83, %c0_84] : memref<2x20x3xf32, #tpu.memory_space<vmem>>, vector<1x20x3xf32>
    %89 = vector.shape_cast %88 : vector<1x20x3xf32> to vector<20x3xf32>
    %cst_85 = arith.constant dense<0.000000e+00> : vector<4x3xf32>
    %90 = tpu.matmul %87, %89, %cst_85 {dimension_numbers = #tpu.dot_dimension_numbers<[1], [0], [0], [1], [0, 0, 1, 1], [], []>} : vector<4x20xf32>, vector<20x3xf32>, vector<4x3xf32> -> vector<4x3xf32>
    %91 = arith.addf %86, %90 : vector<4x3xf32>
    %c0_86 = arith.constant 0 : index
    %c0_87 = arith.constant 0 : index
    %c0_88 = arith.constant 0 : index
    %92 = vector.load %arg16[%c0_86, %c0_87, %c0_88] : memref<1x4x3xf32, #tpu.memory_space<vmem>>, vector<1x4x3xf32>
    %93 = vector.shape_cast %92 : vector<1x4x3xf32> to vector<4x3xf32>
    %94 = vector.shape_cast %91 : vector<4x3xf32> to vector<1x4x3xf32>
    tpu.vector_store %arg16[%c0_86, %c0_87, %c0_88], %94 {strides = array<i32>} : memref<1x4x3xf32, #tpu.memory_space<vmem>>, vector<1x4x3xf32>,
    return
  }
  func.func @transform_0(%arg0: i32) -> (i32, i32) {
    %c0_i32 = arith.constant 0 : i32
    %c0_i32_0 = arith.constant 0 : i32
    return %arg0, %c0_i32 : i32, i32
  }
  func.func @transform_1(%arg0: i32) -> (i32, i32, i32) {
    %c0_i32 = arith.constant 0 : i32
    %c0_i32_0 = arith.constant 0 : i32
    %c0_i32_1 = arith.constant 0 : i32
    %c0_i32_2 = arith.constant 0 : i32
    return %c0_i32, %c0_i32_0, %c0_i32_1 : i32, i32, i32
  }
  func.func @transform_2(%arg0: i32) -> (i32, i32) {
    %c0_i32 = arith.constant 0 : i32
    %c0_i32_0 = arith.constant 0 : i32
    %c0_i32_1 = arith.constant 0 : i32
    return %c0_i32, %c0_i32_0 : i32, i32
  }
  func.func @transform_3(%arg0: i32) -> (i32, i32) {
    %c0_i32 = arith.constant 0 : i32
    %c0_i32_0 = arith.constant 0 : i32
    %c0_i32_1 = arith.constant 0 : i32
    return %c0_i32, %c0_i32_0 : i32, i32
  }
  func.func @transform_4(%arg0: i32) -> (i32, i32) {
    %c0_i32 = arith.constant 0 : i32
    %c0_i32_0 = arith.constant 0 : i32
    %c0_i32_1 = arith.constant 0 : i32
    return %c0_i32, %c0_i32_0 : i32, i32
  }
  func.func @transform_5(%arg0: i32) -> (i32, i32, i32) {
    %c0_i32 = arith.constant 0 : i32
    %c0_i32_0 = arith.constant 0 : i32
    %c0_i32_1 = arith.constant 0 : i32
    %c0_i32_2 = arith.constant 0 : i32
    return %c0_i32, %c0_i32_0, %c0_i32_1 : i32, i32, i32
  }
  func.func @transform_6(%arg0: i32) -> (i32, i32, i32) {
    %c0_i32 = arith.constant 0 : i32
    %c0_i32_0 = arith.constant 0 : i32
    %c0_i32_1 = arith.constant 0 : i32
    %c0_i32_2 = arith.constant 0 : i32
    return %c0_i32, %c0_i32_0, %c0_i32_1 : i32, i32, i32
  }
  func.func @transform_7(%arg0: i32) -> (i32, i32, i32) {
    %c0_i32 = arith.constant 0 : i32
    %c0_i32_0 = arith.constant 0 : i32
    %c0_i32_1 = arith.constant 0 : i32
    %c0_i32_2 = arith.constant 0 : i32
    return %c0_i32, %c0_i32_0, %c0_i32_1 : i32, i32, i32
  }
  func.func @transform_8(%arg0: i32) -> (i32, i32) {
    %c0_i32 = arith.constant 0 : i32
    %c0_i32_0 = arith.constant 0 : i32
    %c0_i32_1 = arith.constant 0 : i32
    return %c0_i32, %c0_i32_0 : i32, i32
  }
  func.func @transform_9(%arg0: i32) -> (i32, i32) {
    %c0_i32 = arith.constant 0 : i32
    %c0_i32_0 = arith.constant 0 : i32
    %c0_i32_1 = arith.constant 0 : i32
    return %c0_i32, %c0_i32_0 : i32, i32
  }
  func.func @transform_10(%arg0: i32) -> (i32, i32) {
    %c0_i32 = arith.constant 0 : i32
    %c0_i32_0 = arith.constant 0 : i32
    %c0_i32_1 = arith.constant 0 : i32
    return %c0_i32, %c0_i32_0 : i32, i32
  }
  func.func @transform_11(%arg0: i32) -> (i32, i32, i32) {
    %c0_i32 = arith.constant 0 : i32
    %c0_i32_0 = arith.constant 0 : i32
    %c0_i32_1 = arith.constant 0 : i32
    %c0_i32_2 = arith.constant 0 : i32
    return %c0_i32, %c0_i32_0, %c0_i32_1 : i32, i32, i32
  }
  func.func @transform_12(%arg0: i32) -> (i32, i32, i32) {
    %c0_i32 = arith.constant 0 : i32
    %c0_i32_0 = arith.constant 0 : i32
    %c0_i32_1 = arith.constant 0 : i32
    %c0_i32_2 = arith.constant 0 : i32
    return %c0_i32, %c0_i32_0, %c0_i32_1 : i32, i32, i32
  }
  func.func @transform_13(%arg0: i32) -> (i32, i32, i32) {
    %c0_i32 = arith.constant 0 : i32
    %c0_i32_0 = arith.constant 0 : i32
    %c0_i32_1 = arith.constant 0 : i32
    %c0_i32_2 = arith.constant 0 : i32
    return %c0_i32, %c0_i32_0, %c0_i32_1 : i32, i32, i32
  }
  func.func @transform_14(%arg0: i32) -> (i32, i32) {
    %c0_i32 = arith.constant 0 : i32
    %c0_i32_0 = arith.constant 0 : i32
    %c0_i32_1 = arith.constant 0 : i32
    return %c0_i32, %c0_i32_0 : i32, i32
  }
  func.func @transform_15(%arg0: i32) -> (i32, i32, i32) {
    %c0_i32 = arith.constant 0 : i32
    %c0_i32_0 = arith.constant 0 : i32
    %c0_i32_1 = arith.constant 0 : i32
    return %arg0, %c0_i32, %c0_i32_0 : i32, i32, i32
  }
}

</mosaic_0001>

<llo_original>
// kernel: food_model_forward.1
$region0: #{food_model_forward.1}
  #allocation0 [shape = 'u32[]', space=smem, size = 0x4, offset = 0x4, fixed_abs, tag = 'smem constant byte address 0x4 - core index']
  #allocation1 [shape = 'u32[144,128]{1,0:T(1,128)}', space=vmem, size = 0x12000, scoped, tag = 'internal scratch']
  %s0 = inlined_call_operand.vmem [shape: f32[128,48], index: 0, kind: input, shape index: {}]
  %s1 = inlined_call_operand.vmem [shape: f32[3,48,140], index: 1, kind: input, shape index: {}]
  %s2 = inlined_call_operand.vmem [shape: f32[1,140], index: 2, kind: input, shape index: {}]
  %s3 = inlined_call_operand.vmem [shape: f32[140,140], index: 3, kind: input, shape index: {}]
  %s4 = inlined_call_operand.vmem [shape: f32[1,140], index: 4, kind: input, shape index: {}]
  %s5 = inlined_call_operand.vmem [shape: f32[2,28,62], index: 5, kind: input, shape index: {}]
  %s6 = inlined_call_operand.vmem [shape: f32[2,140,70], index: 6, kind: input, shape index: {}]
  %s7 = inlined_call_operand.vmem [shape: f32[3,70,50], index: 7, kind: input, shape index: {}]
  %s8 = inlined_call_operand.vmem [shape: f32[1,50], index: 8, kind: input, shape index: {}]
  %s9 = inlined_call_operand.vmem [shape: f32[50,50], index: 9, kind: input, shape index: {}]
  %s10 = inlined_call_operand.vmem [shape: f32[1,50], index: 10, kind: input, shape index: {}]
  %s11 = inlined_call_operand.vmem [shape: f32[2,16,26], index: 11, kind: input, shape index: {}]
  %s12 = inlined_call_operand.vmem [shape: f32[2,50,20], index: 12, kind: input, shape index: {}]
  %s13 = inlined_call_operand.vmem [shape: f32[2,20,3], index: 13, kind: input, shape index: {}]
  %s14 = inlined_call_operand.vmem [shape: f32[1,3], index: 14, kind: input, shape index: {}]
  %s15 = inlined_call_operand.vmem [shape: f32[2,4,3], index: 15, kind: output, shape index: {}]
  %s16 = sld [smem:[#allocation0]]
  $region93: #{food_model_forward.1} parent=0
    _
  %s18 = ssub.s32 1, %s16
  %s19 = scalar_select 0, %s18, %s16
  loop: start=0, step=1, limit=4
  $region2: #{food_model_forward.1} parent=0 // loop_pre_header
    _
  $region3: #{food_model_forward.1} parent=0 // loop_header
    %s21 = sphi 0, %s25
    %p22 = scmp.ge.s32.totalorder %s21, 4
    %s31 = sphi 0, %s33
    %s34 = sphi 0, %s31
    %s35 = sphi 0, %s34
    %s51 = sphi 0, %s35
    %s55 = sphi 0, %s55
    %s57 = sphi 0, %s55
    %s58 = sphi 0, %s57
    %s72 = sphi 0, %s58
    %s76 = sphi 0, %s76
    %s78 = sphi 0, %s76
    %s79 = sphi 0, %s78
    %s93 = sphi 0, %s79
    %s97 = sphi 0, %s97
    %s99 = sphi 0, %s97
    %s100 = sphi 0, %s99
    %s114 = sphi 0, %s100
    %s118 = sphi 0, %s118
    %s120 = sphi 0, %s118
    %s121 = sphi 0, %s120
    %s135 = sphi 0, %s121
    %s139 = sphi 0, %s139
    %s141 = sphi 0, %s139
    %s142 = sphi 0, %s141
    %s156 = sphi 0, %s142
    %s160 = sphi 0, %s160
    %s162 = sphi 0, %s160
    %s163 = sphi 0, %s162
    %s177 = sphi 0, %s163
    %s181 = sphi 0, %s181
    %s183 = sphi 0, %s181
    %s184 = sphi 0, %s183
    %s198 = sphi 0, %s184
    %s202 = sphi 0, %s202
    %s204 = sphi 0, %s202
    %s205 = sphi 0, %s204
    %s219 = sphi 0, %s205
    %s223 = sphi 0, %s223
    %s225 = sphi 0, %s223
    %s226 = sphi 0, %s225
    %s240 = sphi 0, %s226
    %s244 = sphi 0, %s244
    %s246 = sphi 0, %s244
    %s247 = sphi 0, %s246
    %s261 = sphi 0, %s247
    %s265 = sphi 0, %s265
    %s267 = sphi 0, %s265
    %s268 = sphi 0, %s267
    %s282 = sphi 0, %s268
    %s286 = sphi 0, %s286
    %s288 = sphi 0, %s286
    %s289 = sphi 0, %s288
    %s303 = sphi 0, %s289
    %s307 = sphi 0, %s307
    %s309 = sphi 0, %s307
    %s310 = sphi 0, %s309
    %s324 = sphi 0, %s310
    %s328 = sphi 0, %s328
    %s330 = sphi 0, %s328
    %s331 = sphi 0, %s330
    %s345 = sphi 0, %s331
    %s351 = sphi 0, %s353
    %s354 = sphi 0, %s351
    %s355 = sphi 0, %s354
    %s371 = sphi 0, %s355
  $region4: #{food_model_forward.1} parent=0 // loop_header_branch
    %24 = sbr.rel (%p22) target = $region8
  $region5: #{food_model_forward.1} parent=0 // loop_body
    %s26 = ssub.s32 %s21, 1
    %s27 = ssub.s32 %s21, 2
    %s28 = sadd.s32 %s21, 1
    %s29 = ssub.s32 %s21, %s28
    %p30 = scmp.eq.s32.totalorder %s29, 0
    %s32 = sadd.s32 %s31, 1
    %s33 = scalar_select %p30, %s31, %s32
    %p36 = pneg %p30
    %p37 = scmp.eq.s32.totalorder %s21, 1
    %p38 = por %p36, %p37
    %p39 = scmp.ne.s32.totalorder %s31, %s34
    %p40 = scmp.eq.s32.totalorder %s21, 0
    %p41 = por %p39, %p40
    %p42 = scmp.ne.s32.totalorder %s31, %s34
    %p43 = scmp.eq.s32.totalorder %s26, 1
    %p44 = por %p42, %p43
    %p45 = scmp.ne.s32.totalorder %s34, %s35
    %p46 = scmp.eq.s32.totalorder %s26, 0
    %p47 = por %p45, %p46
    %p48 = scmp.ne.s32.totalorder %s34, %s35
    %p49 = scmp.eq.s32.totalorder %s27, 1
    %p50 = por %p48, %p49
    %p52 = scmp.ne.s32.totalorder %s35, %s51
    %p53 = scmp.eq.s32.totalorder %s27, 0
    %p54 = por %p52, %p53
    %s56 = sadd.s32 %s55, 1
    %p59 = scmp.eq.s32.totalorder %s21, 1
    %p60 = scmp.ne.s32.totalorder %s55, %s57
    %p61 = scmp.eq.s32.totalorder %s21, 0
    %p62 = por %p60, %p61
    %p63 = scmp.ne.s32.totalorder %s55, %s57
    %p64 = scmp.eq.s32.totalorder %s26, 1
    %p65 = por %p63, %p64
    %p66 = scmp.ne.s32.totalorder %s57, %s58
    %p67 = scmp.eq.s32.totalorder %s26, 0
    %p68 = por %p66, %p67
    %p69 = scmp.ne.s32.totalorder %s57, %s58
    %p70 = scmp.eq.s32.totalorder %s27, 1
    %p71 = por %p69, %p70
    %p73 = scmp.ne.s32.totalorder %s58, %s72
    %p74 = scmp.eq.s32.totalorder %s27, 0
    %p75 = por %p73, %p74
    %s77 = sadd.s32 %s76, 1
    %p80 = scmp.eq.s32.totalorder %s21, 1
    %p81 = scmp.ne.s32.totalorder %s76, %s78
    %p82 = scmp.eq.s32.totalorder %s21, 0
    %p83 = por %p81, %p82
    %p84 = scmp.ne.s32.totalorder %s76, %s78
    %p85 = scmp.eq.s32.totalorder %s26, 1
    %p86 = por %p84, %p85
    %p87 = scmp.ne.s32.totalorder %s78, %s79
    %p88 = scmp.eq.s32.totalorder %s26, 0
    %p89 = por %p87, %p88
    %p90 = scmp.ne.s32.totalorder %s78, %s79
    %p91 = scmp.eq.s32.totalorder %s27, 1
    %p92 = por %p90, %p91
    %p94 = scmp.ne.s32.totalorder %s79, %s93
    %p95 = scmp.eq.s32.totalorder %s27, 0
    %p96 = por %p94, %p95
    %s98 = sadd.s32 %s97, 1
    %p101 = scmp.eq.s32.totalorder %s21, 1
    %p102 = scmp.ne.s32.totalorder %s97, %s99
    %p103 = scmp.eq.s32.totalorder %s21, 0
    %p104 = por %p102, %p103
    %p105 = scmp.ne.s32.totalorder %s97, %s99
    %p106 = scmp.eq.s32.totalorder %s26, 1
    %p107 = por %p105, %p106
    %p108 = scmp.ne.s32.totalorder %s99, %s100
    %p109 = scmp.eq.s32.totalorder %s26, 0
    %p110 = por %p108, %p109
    %p111 = scmp.ne.s32.totalorder %s99, %s100
    %p112 = scmp.eq.s32.totalorder %s27, 1
    %p113 = por %p111, %p112
    %p115 = scmp.ne.s32.totalorder %s100, %s114
    %p116 = scmp.eq.s32.totalorder %s27, 0
    %p117 = por %p115, %p116
    %s119 = sadd.s32 %s118, 1
    %p122 = scmp.eq.s32.totalorder %s21, 1
    %p123 = scmp.ne.s32.totalorder %s118, %s120
    %p124 = scmp.eq.s32.totalorder %s21, 0
    %p125 = por %p123, %p124
    %p126 = scmp.ne.s32.totalorder %s118, %s120
    %p127 = scmp.eq.s32.totalorder %s26, 1
    %p128 = por %p126, %p127
    %p129 = scmp.ne.s32.totalorder %s120, %s121
    %p130 = scmp.eq.s32.totalorder %s26, 0
    %p131 = por %p129, %p130
    %p132 = scmp.ne.s32.totalorder %s120, %s121
    %p133 = scmp.eq.s32.totalorder %s27, 1
    %p134 = por %p132, %p133
    %p136 = scmp.ne.s32.totalorder %s121, %s135
    %p137 = scmp.eq.s32.totalorder %s27, 0
    %p138 = por %p136, %p137
    %s140 = sadd.s32 %s139, 1
    %p143 = scmp.eq.s32.totalorder %s21, 1
    %p144 = scmp.ne.s32.totalorder %s139, %s141
    %p145 = scmp.eq.s32.totalorder %s21, 0
    %p146 = por %p144, %p145
    %p147 = scmp.ne.s32.totalorder %s139, %s141
    %p148 = scmp.eq.s32.totalorder %s26, 1
    %p149 = por %p147, %p148
    %p150 = scmp.ne.s32.totalorder %s141, %s142
    %p151 = scmp.eq.s32.totalorder %s26, 0
    %p152 = por %p150, %p151
    %p153 = scmp.ne.s32.totalorder %s141, %s142
    %p154 = scmp.eq.s32.totalorder %s27, 1
    %p155 = por %p153, %p154
    %p157 = scmp.ne.s32.totalorder %s142, %s156
    %p158 = scmp.eq.s32.totalorder %s27, 0
    %p159 = por %p157, %p158
    %s161 = sadd.s32 %s160, 1
    %p164 = scmp.eq.s32.totalorder %s21, 1
    %p165 = scmp.ne.s32.totalorder %s160, %s162
    %p166 = scmp.eq.s32.totalorder %s21, 0
    %p167 = por %p165, %p166
    %p168 = scmp.ne.s32.totalorder %s160, %s162
    %p169 = scmp.eq.s32.totalorder %s26, 1
    %p170 = por %p168, %p169
    %p171 = scmp.ne.s32.totalorder %s162, %s163
    %p172 = scmp.eq.s32.totalorder %s26, 0
    %p173 = por %p171, %p172
    %p174 = scmp.ne.s32.totalorder %s162, %s163
    %p175 = scmp.eq.s32.totalorder %s27, 1
    %p176 = por %p174, %p175
    %p178 = scmp.ne.s32.totalorder %s163, %s177
    %p179 = scmp.eq.s32.totalorder %s27, 0
    %p180 = por %p178, %p179
    %s182 = sadd.s32 %s181, 1
    %p185 = scmp.eq.s32.totalorder %s21, 1
    %p186 = scmp.ne.s32.totalorder %s181, %s183
    %p187 = scmp.eq.s32.totalorder %s21, 0
    %p188 = por %p186, %p187
    %p189 = scmp.ne.s32.totalorder %s181, %s183
    %p190 = scmp.eq.s32.totalorder %s26, 1
    %p191 = por %p189, %p190
    %p192 = scmp.ne.s32.totalorder %s183, %s184
    %p193 = scmp.eq.s32.totalorder %s26, 0
    %p194 = por %p192, %p193
    %p195 = scmp.ne.s32.totalorder %s183, %s184
    %p196 = scmp.eq.s32.totalorder %s27, 1
    %p197 = por %p195, %p196
    %p199 = scmp.ne.s32.totalorder %s184, %s198
    %p200 = scmp.eq.s32.totalorder %s27, 0
    %p201 = por %p199, %p200
    %s203 = sadd.s32 %s202, 1
    %p206 = scmp.eq.s32.totalorder %s21, 1
    %p207 = scmp.ne.s32.totalorder %s202, %s204
    %p208 = scmp.eq.s32.totalorder %s21, 0
    %p209 = por %p207, %p208
    %p210 = scmp.ne.s32.totalorder %s202, %s204
    %p211 = scmp.eq.s32.totalorder %s26, 1
    %p212 = por %p210, %p211
    %p213 = scmp.ne.s32.totalorder %s204, %s205
    %p214 = scmp.eq.s32.totalorder %s26, 0
    %p215 = por %p213, %p214
    %p216 = scmp.ne.s32.totalorder %s204, %s205
    %p217 = scmp.eq.s32.totalorder %s27, 1
    %p218 = por %p216, %p217
    %p220 = scmp.ne.s32.totalorder %s205, %s219
    %p221 = scmp.eq.s32.totalorder %s27, 0
    %p222 = por %p220, %p221
    %s224 = sadd.s32 %s223, 1
    %p227 = scmp.eq.s32.totalorder %s21, 1
    %p228 = scmp.ne.s32.totalorder %s223, %s225
    %p229 = scmp.eq.s32.totalorder %s21, 0
    %p230 = por %p228, %p229
    %p231 = scmp.ne.s32.totalorder %s223, %s225
    %p232 = scmp.eq.s32.totalorder %s26, 1
    %p233 = por %p231, %p232
    %p234 = scmp.ne.s32.totalorder %s225, %s226
    %p235 = scmp.eq.s32.totalorder %s26, 0
    %p236 = por %p234, %p235
    %p237 = scmp.ne.s32.totalorder %s225, %s226
    %p238 = scmp.eq.s32.totalorder %s27, 1
    %p239 = por %p237, %p238
    %p241 = scmp.ne.s32.totalorder %s226, %s240
    %p242 = scmp.eq.s32.totalorder %s27, 0
    %p243 = por %p241, %p242
    %s245 = sadd.s32 %s244, 1
    %p248 = scmp.eq.s32.totalorder %s21, 1
    %p249 = scmp.ne.s32.totalorder %s244, %s246
    %p250 = scmp.eq.s32.totalorder %s21, 0
    %p251 = por %p249, %p250
    %p252 = scmp.ne.s32.totalorder %s244, %s246
    %p253 = scmp.eq.s32.totalorder %s26, 1
    %p254 = por %p252, %p253
    %p255 = scmp.ne.s32.totalorder %s246, %s247
    %p256 = scmp.eq.s32.totalorder %s26, 0
    %p257 = por %p255, %p256
    %p258 = scmp.ne.s32.totalorder %s246, %s247
    %p259 = scmp.eq.s32.totalorder %s27, 1
    %p260 = por %p258, %p259
    %p262 = scmp.ne.s32.totalorder %s247, %s261
    %p263 = scmp.eq.s32.totalorder %s27, 0
    %p264 = por %p262, %p263
    %s266 = sadd.s32 %s265, 1
    %p269 = scmp.eq.s32.totalorder %s21, 1
    %p270 = scmp.ne.s32.totalorder %s265, %s267
    %p271 = scmp.eq.s32.totalorder %s21, 0
    %p272 = por %p270, %p271
    %p273 = scmp.ne.s32.totalorder %s265, %s267
    %p274 = scmp.eq.s32.totalorder %s26, 1
    %p275 = por %p273, %p274
    %p276 = scmp.ne.s32.totalorder %s267, %s268
    %p277 = scmp.eq.s32.totalorder %s26, 0
    %p278 = por %p276, %p277
    %p279 = scmp.ne.s32.totalorder %s267, %s268
    %p280 = scmp.eq.s32.totalorder %s27, 1
    %p281 = por %p279, %p280
    %p283 = scmp.ne.s32.totalorder %s268, %s282
    %p284 = scmp.eq.s32.totalorder %s27, 0
    %p285 = por %p283, %p284
    %s287 = sadd.s32 %s286, 1
    %p290 = scmp.eq.s32.totalorder %s21, 1
    %p291 = scmp.ne.s32.totalorder %s286, %s288
    %p292 = scmp.eq.s32.totalorder %s21, 0
    %p293 = por %p291, %p292
    %p294 = scmp.ne.s32.totalorder %s286, %s288
    %p295 = scmp.eq.s32.totalorder %s26, 1
    %p296 = por %p294, %p295
    %p297 = scmp.ne.s32.totalorder %s288, %s289
    %p298 = scmp.eq.s32.totalorder %s26, 0
    %p299 = por %p297, %p298
    %p300 = scmp.ne.s32.totalorder %s288, %s289
    %p301 = scmp.eq.s32.totalorder %s27, 1
    %p302 = por %p300, %p301
    %p304 = scmp.ne.s32.totalorder %s289, %s303
    %p305 = scmp.eq.s32.totalorder %s27, 0
    %p306 = por %p304, %p305
    %s308 = sadd.s32 %s307, 1
    %p311 = scmp.eq.s32.totalorder %s21, 1
    %p312 = scmp.ne.s32.totalorder %s307, %s309
    %p313 = scmp.eq.s32.totalorder %s21, 0
    %p314 = por %p312, %p313
    %p315 = scmp.ne.s32.totalorder %s307, %s309
    %p316 = scmp.eq.s32.totalorder %s26, 1
    %p317 = por %p315, %p316
    %p318 = scmp.ne.s32.totalorder %s309, %s310
    %p319 = scmp.eq.s32.totalorder %s26, 0
    %p320 = por %p318, %p319
    %p321 = scmp.ne.s32.totalorder %s309, %s310
    %p322 = scmp.eq.s32.totalorder %s27, 1
    %p323 = por %p321, %p322
    %p325 = scmp.ne.s32.totalorder %s310, %s324
    %p326 = scmp.eq.s32.totalorder %s27, 0
    %p327 = por %p325, %p326
    %s329 = sadd.s32 %s328, 1
    %p332 = scmp.eq.s32.totalorder %s21, 1
    %p333 = scmp.ne.s32.totalorder %s328, %s330
    %p334 = scmp.eq.s32.totalorder %s21, 0
    %p335 = por %p333, %p334
    %p336 = scmp.ne.s32.totalorder %s328, %s330
    %p337 = scmp.eq.s32.totalorder %s26, 1
    %p338 = por %p336, %p337
    %p339 = scmp.ne.s32.totalorder %s330, %s331
    %p340 = scmp.eq.s32.totalorder %s26, 0
    %p341 = por %p339, %p340
    %p342 = scmp.ne.s32.totalorder %s330, %s331
    %p343 = scmp.eq.s32.totalorder %s27, 1
    %p344 = por %p342, %p343
    %p346 = scmp.ne.s32.totalorder %s331, %s345
    %p347 = scmp.eq.s32.totalorder %s27, 0
    %p348 = por %p346, %p347
    %s349 = ssub.s32 %s21, %s28
    %p350 = scmp.eq.s32.totalorder %s349, 0
    %s352 = sadd.s32 %s351, 1
    %s353 = scalar_select %p350, %s351, %s352
    %p356 = pneg %p350
    %p357 = scmp.eq.s32.totalorder %s21, 1
    %p358 = por %p356, %p357
    %p359 = scmp.ne.s32.totalorder %s351, %s354
    %p360 = scmp.eq.s32.totalorder %s21, 0
    %p361 = por %p359, %p360
    %p362 = scmp.ne.s32.totalorder %s351, %s354
    %p363 = scmp.eq.s32.totalorder %s26, 1
    %p364 = por %p362, %p363
    %p365 = scmp.ne.s32.totalorder %s354, %s355
    %p366 = scmp.eq.s32.totalorder %s26, 0
    %p367 = por %p365, %p366
    %p368 = scmp.ne.s32.totalorder %s354, %s355
    %p369 = scmp.eq.s32.totalorder %s27, 1
    %p370 = por %p368, %p369
    %p372 = scmp.ne.s32.totalorder %s355, %s371
    %p373 = scmp.eq.s32.totalorder %s27, 0
    %p374 = por %p372, %p373
    %p375 = scmp.le.s32.totalorder 1, %s21
    %p376 = scmp.lt.s32.totalorder %s21, 3
    %p377 = pnand %p375, %p376
    %p378 = pneg %p377
    // Predicated region
    $region9: #{food_model_forward.1} parent=5 // pred_check
      _
    $region10: #{food_model_forward.1} parent=5 // pred_check_branch
      %380 = sbr.rel (%p377) target = $region12
    $region11: #{food_model_forward.1} parent=5 // pred_region
      %s381 = ssub.s32 %s21, 1
      // Predicated region
      $region13: #{food_model_forward.1} parent=11 // pred_check
        %p382 = pneg %p68
      $region14: #{food_model_forward.1} parent=11 // pred_check_branch
        %384 = sbr.rel (%p382) target = $region16
      $region15: #{food_model_forward.1} parent=11 // pred_region
        _
      $region16: #{food_model_forward.1} parent=11 // pred_fallthru
        _
      // Predicated region
      $region17: #{food_model_forward.1} parent=11 // pred_check
        %p385 = pneg %p89
      $region18: #{food_model_forward.1} parent=11 // pred_check_branch
        %387 = sbr.rel (%p385) target = $region20
      $region19: #{food_model_forward.1} parent=11 // pred_region
        _
      $region20: #{food_model_forward.1} parent=11 // pred_fallthru
        _
      // Predicated region
      $region21: #{food_model_forward.1} parent=11 // pred_check
        %p388 = pneg %p110
      $region22: #{food_model_forward.1} parent=11 // pred_check_branch
        %390 = sbr.rel (%p388) target = $region24
      $region23: #{food_model_forward.1} parent=11 // pred_region
        _
      $region24: #{food_model_forward.1} parent=11 // pred_fallthru
        _
      // Predicated region
      $region25: #{food_model_forward.1} parent=11 // pred_check
        %p391 = pneg %p131
      $region26: #{food_model_forward.1} parent=11 // pred_check_branch
        %393 = sbr.rel (%p391) target = $region28
      $region27: #{food_model_forward.1} parent=11 // pred_region
        _
      $region28: #{food_model_forward.1} parent=11 // pred_fallthru
        _
      // Predicated region
      $region29: #{food_model_forward.1} parent=11 // pred_check
        %p394 = pneg %p152
      $region30: #{food_model_forward.1} parent=11 // pred_check_branch
        %396 = sbr.rel (%p394) target = $region32
      $region31: #{food_model_forward.1} parent=11 // pred_region
        _
      $region32: #{food_model_forward.1} parent=11 // pred_fallthru
        _
      // Predicated region
      $region33: #{food_model_forward.1} parent=11 // pred_check
        %p397 = pneg %p173
      $region34: #{food_model_forward.1} parent=11 // pred_check_branch
        %399 = sbr.rel (%p397) target = $region36
      $region35: #{food_model_forward.1} parent=11 // pred_region
        _
      $region36: #{food_model_forward.1} parent=11 // pred_fallthru
        _
      // Predicated region
      $region37: #{food_model_forward.1} parent=11 // pred_check
        %p400 = pneg %p194
      $region38: #{food_model_forward.1} parent=11 // pred_check_branch
        %402 = sbr.rel (%p400) target = $region40
      $region39: #{food_model_forward.1} parent=11 // pred_region
        _
      $region40: #{food_model_forward.1} parent=11 // pred_fallthru
        _
      // Predicated region
      $region41: #{food_model_forward.1} parent=11 // pred_check
        %p403 = pneg %p215
      $region42: #{food_model_forward.1} parent=11 // pred_check_branch
        %405 = sbr.rel (%p403) target = $region44
      $region43: #{food_model_forward.1} parent=11 // pred_region
        _
      $region44: #{food_model_forward.1} parent=11 // pred_fallthru
        _
      // Predicated region
      $region45: #{food_model_forward.1} parent=11 // pred_check
        %p406 = pneg %p236
      $region46: #{food_model_forward.1} parent=11 // pred_check_branch
        %408 = sbr.rel (%p406) target = $region48
      $region47: #{food_model_forward.1} parent=11 // pred_region
        _
      $region48: #{food_model_forward.1} parent=11 // pred_fallthru
        _
      // Predicated region
      $region49: #{food_model_forward.1} parent=11 // pred_check
        %p409 = pneg %p257
      $region50: #{food_model_forward.1} parent=11 // pred_check_branch
        %411 = sbr.rel (%p409) target = $region52
      $region51: #{food_model_forward.1} parent=11 // pred_region
        _
      $region52: #{food_model_forward.1} parent=11 // pred_fallthru
        _
      // Predicated region
      $region53: #{food_model_forward.1} parent=11 // pred_check
        %p412 = pneg %p278
      $region54: #{food_model_forward.1} parent=11 // pred_check_branch
        %414 = sbr.rel (%p412) target = $region56
      $region55: #{food_model_forward.1} parent=11 // pred_region
        _
      $region56: #{food_model_forward.1} parent=11 // pred_fallthru
        _
      // Predicated region
      $region57: #{food_model_forward.1} parent=11 // pred_check
        %p415 = pneg %p299
      $region58: #{food_model_forward.1} parent=11 // pred_check_branch
        %417 = sbr.rel (%p415) target = $region60
      $region59: #{food_model_forward.1} parent=11 // pred_region
        _
      $region60: #{food_model_forward.1} parent=11 // pred_fallthru
        _
      // Predicated region
      $region61: #{food_model_forward.1} parent=11 // pred_check
        %p418 = pneg %p320
      $region62: #{food_model_forward.1} parent=11 // pred_check_branch
        %420 = sbr.rel (%p418) target = $region64
      $region63: #{food_model_forward.1} parent=11 // pred_region
        _
      $region64: #{food_model_forward.1} parent=11 // pred_fallthru
        _
      // Predicated region
      $region65: #{food_model_forward.1} parent=11 // pred_check
        %p421 = pneg %p341
      $region66: #{food_model_forward.1} parent=11 // pred_check_branch
        %423 = sbr.rel (%p421) target = $region68
      $region67: #{food_model_forward.1} parent=11 // pred_region
        _
      $region68: #{food_model_forward.1} parent=11 // pred_fallthru
        _
    $region12: #{food_model_forward.1} parent=5 // pred_fallthru
      _
    %p424 = scmp.lt.s32.totalorder %s21, 2
    // Predicated region
    $region69: #{food_model_forward.1} parent=5 // pred_check
      %p425 = pneg %p424
    $region70: #{food_model_forward.1} parent=5 // pred_check_branch
      %427 = sbr.rel (%p425) target = $region72
    $region71: #{food_model_forward.1} parent=5 // pred_region
      // Predicated region
      $region73: #{food_model_forward.1} parent=71 // pred_check
        %p428 = pneg %p41
      $region74: #{food_model_forward.1} parent=71 // pred_check_branch
        %430 = sbr.rel (%p428) target = $region76
      $region75: #{food_model_forward.1} parent=71 // pred_region
        %s431 = smul.u32 8, %s21
        %p432 = scmp.lt.s32.totalorder %s431, 15
        %s433 = scalar_select %p432, %s431, 15
        %s434 = smul.addr %s433, 8
        %s435 = scalar_lea.vmem %s0, %s434
        %s436 = smul.u32 8, %s21
      $region76: #{food_model_forward.1} parent=71 // pred_fallthru
        _
    $region72: #{food_model_forward.1} parent=5 // pred_fallthru
      _
    %p437 = scmp.le.s32.totalorder 1, %s21
    %p438 = scmp.lt.s32.totalorder %s21, 3
    %p439 = pnand %p437, %p438
    %p440 = pneg %p439
    // Predicated region
    $region77: #{food_model_forward.1} parent=5 // pred_check
      _
    $region78: #{food_model_forward.1} parent=5 // pred_check_branch
      %442 = sbr.rel (%p439) target = $region80
    $region79: #{food_model_forward.1} parent=5 // pred_region
      %s443 = ssub.s32 %s21, 1
      %s444 = smul.u32 8, %s26
      %p445 = scmp.lt.s32.totalorder %s444, 15
      %s446 = scalar_select %p445, %s444, 15
      %s447 = smul.addr %s446, 8
      %s448 = scalar_lea.vmem %s0, %s447
      %p449 = pneg %p47
      %p450 = pneg %p44
      %p451 = pneg %p68
      %p452 = pneg %p65
      %p453 = pneg %p89
      %p454 = pneg %p86
      %p455 = pneg %p110
      %p456 = pneg %p107
      %p457 = pneg %p131
      %p458 = pneg %p128
      %p459 = pneg %p152
      %p460 = pneg %p149
      %p461 = pneg %p173
      %p462 = pneg %p170
      %p463 = pneg %p194
      %p464 = pneg %p191
      %p465 = pneg %p215
      %p466 = pneg %p212
      %p467 = pneg %p236
      %p468 = pneg %p233
      %p469 = pneg %p257
      %p470 = pneg %p254
      %p471 = pneg %p278
      %p472 = pneg %p275
      %p473 = pneg %p299
      %p474 = pneg %p296
      %p475 = pneg %p320
      %p476 = pneg %p317
      %p477 = pneg %p341
      %p478 = pneg %p338
      %p479 = pneg %p367
      %p480 = pneg %p364
      %p481 = scmp.lt.s32.totalorder %s26, 1
      %s482 = scalar_select %p481, %s26, 1
      %s483 = smul.addr %s482, 4
      %s484 = scalar_lea.vmem %s15, %s483
      %s485 = smul.u32 8, %s26
      %p486 = scmp.lt.s32.totalorder %s485, 15
      %s487 = scalar_select %p486, %s485, 15
      %s488 = smul.addr %s487, 8
      %s489 = scalar_lea.vmem %s0, %s488
      %s490 = smul.u32 8, %s26
      %p491 = scmp.lt.s32.totalorder %s26, 1
      %s492 = scalar_select %p491, %s26, 1
      %s493 = smul.addr %s492, 4
      %s494 = scalar_lea.vmem %s15, %s493
      %v495 = vld [vmem:[%s489] sm:$0xff]
      %v496 = vld [vmem:[%s489 + $0x8] sm:$0xff]
      %v497 = vld [vmem:[%s489 + $0x10] sm:$0xff]
      %v498 = vld [vmem:[%s489 + $0x18] sm:$0xff]
      %v499 = vld [vmem:[%s489 + $0x20] sm:$0xff]
      %v500 = vld [vmem:[%s489 + $0x28] sm:$0xff]
      %v501 = vld [vmem:[%s489 + $0x30] sm:$0xff]
      %v502 = vld [vmem:[%s489 + $0x38] sm:$0x3f]
      %v503 = vld [vmem:[%s1] sm:$0xff]
      %v504 = vld [vmem:[%s1 + $0x8] sm:$0xff]
      %v505 = vld [vmem:[%s1 + $0x10] sm:$0xff]
      %v506 = vld [vmem:[%s1 + $0x18] sm:$0xff]
      %v507 = vld [vmem:[%s1 + $0x20] sm:$0xff]
      %v508 = vld [vmem:[%s1 + $0x28] sm:$0xff]
      %v509 = vld [vmem:[%s1 + $0x30] sm:$0xff]
      %v510 = vld [vmem:[%s1 + $0x38] sm:$0xff]
      %v511 = vld [vmem:[%s1 + $0x40] sm:$0xff]
      %v512 = vld [vmem:[%s1 + $0x48] sm:$0xff]
      %v513 = vld [vmem:[%s1 + $0x50] sm:$0xff]
      %v514 = vld [vmem:[%s1 + $0x58] sm:$0xff]
      %v515 = vld [vmem:[%s489 + $0x1] sm:$0xff]
      %v516 = vld [vmem:[%s489 + $0x9] sm:$0xff]
      %v517 = vld [vmem:[%s489 + $0x11] sm:$0xff]
      %v518 = vld [vmem:[%s489 + $0x19] sm:$0xff]
      %v519 = vld [vmem:[%s489 + $0x21] sm:$0xff]
      %v520 = vld [vmem:[%s489 + $0x29] sm:$0xff]
      %v521 = vld [vmem:[%s489 + $0x31] sm:$0xff]
      %v522 = vld [vmem:[%s489 + $0x39] sm:$0x3f]
      %s523 = scalar_lea.vmem %s1, 96
      %v524 = vld [vmem:[%s523] sm:$0xff]
      %v525 = vld [vmem:[%s523 + $0x8] sm:$0xff]
      %v526 = vld [vmem:[%s523 + $0x10] sm:$0xff]
      %v527 = vld [vmem:[%s523 + $0x18] sm:$0xff]
      %v528 = vld [vmem:[%s523 + $0x20] sm:$0xff]
      %v529 = vld [vmem:[%s523 + $0x28] sm:$0xff]
      %v530 = vld [vmem:[%s523 + $0x30] sm:$0xff]
      %v531 = vld [vmem:[%s523 + $0x38] sm:$0xff]
      %v532 = vld [vmem:[%s523 + $0x40] sm:$0xff]
      %v533 = vld [vmem:[%s523 + $0x48] sm:$0xff]
      %v534 = vld [vmem:[%s523 + $0x50] sm:$0xff]
      %v535 = vld [vmem:[%s523 + $0x58] sm:$0xff]
      %vm536 = vcmask 392192
      %v538 = vsel %vm536, %v515, 0
      %v541 = vsel %vm536, %v516, 0
      %v544 = vsel %vm536, %v517, 0
      %v547 = vsel %vm536, %v518, 0
      %v550 = vsel %vm536, %v519, 0
      %v553 = vsel %vm536, %v520, 0
      %v556 = vsel %vm536, %v521, 0
      %v559 = vsel %vm536, %v522, 0
      %561 = vmatprep.subr.mxu0 %v525
      %562 = vmatpush1.msra.mxu0 %v524
      %563 = vmatprep.subr.mxu0 %v527
      %564 = vmatpush1.msra.mxu0 %v526
      %565 = vmatprep.subr.mxu0 %v529
      %566 = vmatpush1.msra.mxu0 %v528
      %567 = vmatprep.subr.mxu0 %v531
      %568 = vmatpush1.msra.mxu0 %v530
      %569 = vmatprep.subr.mxu0 %v533
      %570 = vmatpush1.msra.mxu0 %v532
      %571 = vmatprep.subr.mxu0 %v535
      %572 = vmatpush1.msra.mxu0 %v534
      %573 = vmatprep.subr.mxu0 0.0
      %574 = vmatpush1.msra.mxu0 0.0
      %575 = vmatprep.subr.mxu0 0.0
      %576 = vmatpush1.msra.mxu0 0.0
      %577 = vmatprep.subr.mxu0 0.0
      %578 = vmatpush1.msra.mxu0 0.0
      %579 = vmatprep.subr.mxu0 0.0
      %580 = vmatpush1.msra.mxu0 0.0
      %581 = vmatprep.subr.mxu0 0.0
      %582 = vmatpush1.msra.mxu0 0.0
      %583 = vmatprep.subr.mxu0 0.0
      %584 = vmatpush1.msra.mxu0 0.0
      %585 = vmatprep.subr.mxu0 0.0
      %586 = vmatpush1.msra.mxu0 0.0
      %587 = vmatprep.subr.mxu0 0.0
      %588 = vmatpush1.msra.mxu0 0.0
      %589 = vmatprep.subr.mxu0 0.0
      %590 = vmatpush1.msra.mxu0 0.0
      %591 = vmatprep.subr.mxu0 0.0
      %592 = vmatpush1.msra.mxu0 0.0
      %593 = vmatprep.subr.mxu0 0.0
      %594 = vmatpush1.msra.mxu0 0.0
      %595 = vmatprep.subr.mxu0 0.0
      %596 = vmatpush1.msra.mxu0 0.0
      %597 = vmatprep.subr.mxu0 0.0
      %598 = vmatpush1.msra.mxu0 0.0
      %599 = vmatprep.subr.mxu0 0.0
      %600 = vmatpush1.msra.mxu0 0.0
      %601 = vmatprep.subr.mxu0 0.0
      %602 = vmatpush1.msra.mxu0 0.0
      %603 = vmatprep.subr.mxu0 0.0
      %604 = vmatpush1.msra.mxu0 0.0
      %605 = vmatprep.subr.mxu0 0.0
      %606 = vmatpush1.msra.mxu0 0.0
      %607 = vmatprep.subr.mxu0 0.0
      %608 = vmatpush1.msra.mxu0 0.0
      %609 = vmatprep.subr.mxu0 0.0
      %610 = vmatpush1.msra.mxu0 0.0
      %611 = vmatprep.subr.mxu0 0.0
      %612 = vmatpush1.msra.mxu0 0.0
      %613 = vmatprep.subr.mxu0 0.0
      %614 = vmatpush1.msra.mxu0 0.0
      %615 = vmatprep.subr.mxu0 0.0
      %616 = vmatpush1.msra.mxu0 0.0
      %617 = vmatprep.subr.mxu0 0.0
      %618 = vmatpush1.msra.mxu0 0.0
      %619 = vmatprep.subr.mxu0 0.0
      %620 = vmatpush1.msra.mxu0 0.0
      %621 = vmatprep.subr.mxu0 0.0
      %622 = vmatpush1.msra.mxu0 0.0
      %623 = vmatprep.subr.mxu0 0.0
      %624 = vmatpush1.msra.mxu0 0.0
      %625 = vmatprep.mubr.f32.mxu0 0.0
      %626 = vmatmul.mubr.f32.gmra.mrb[0].mxu0 %v538
      %v627 = vpop.f32.mrb[0].mxu0
      %v628 = vadd.f32 0.0, %v627
      %v629 = vpop.f32.mrb[0].mxu0
      %v630 = vadd.f32 0.0, %v629
      %631 = vmatprep.mubr.f32.mxu0 0.0
      %632 = vmatmul.mubr.f32.gmra.mrb[0].mxu0 %v541
      %v633 = vpop.f32.mrb[0].mxu0
      %v634 = vadd.f32 0.0, %v633
      %v635 = vpop.f32.mrb[0].mxu0
      %v636 = vadd.f32 0.0, %v635
      %637 = vmatprep.mubr.f32.mxu0 0.0
      %638 = vmatmul.mubr.f32.gmra.mrb[0].mxu0 %v544
      %v639 = vpop.f32.mrb[0].mxu0
      %v640 = vadd.f32 0.0, %v639
      %v641 = vpop.f32.mrb[0].mxu0
      %v642 = vadd.f32 0.0, %v641
      %643 = vmatprep.mubr.f32.mxu0 0.0
      %644 = vmatmul.mubr.f32.gmra.mrb[0].mxu0 %v547
      %v645 = vpop.f32.mrb[0].mxu0
      %v646 = vadd.f32 0.0, %v645
      %v647 = vpop.f32.mrb[0].mxu0
      %v648 = vadd.f32 0.0, %v647
      %649 = vmatprep.mubr.f32.mxu0 0.0
      %650 = vmatmul.mubr.f32.gmra.mrb[0].mxu0 %v550
      %v651 = vpop.f32.mrb[0].mxu0
      %v652 = vadd.f32 0.0, %v651
      %v653 = vpop.f32.mrb[0].mxu0
      %v654 = vadd.f32 0.0, %v653
      %655 = vmatprep.mubr.f32.mxu0 0.0
      %656 = vmatmul.mubr.f32.gmra.mrb[0].mxu0 %v553
      %v657 = vpop.f32.mrb[0].mxu0
      %v658 = vadd.f32 0.0, %v657
      %v659 = vpop.f32.mrb[0].mxu0
      %v660 = vadd.f32 0.0, %v659
      %661 = vmatprep.mubr.f32.mxu0 0.0
      %662 = vmatmul.mubr.f32.gmra.mrb[0].mxu0 %v556
      %v663 = vpop.f32.mrb[0].mxu0
      %v664 = vadd.f32 0.0, %v663
      %v665 = vpop.f32.mrb[0].mxu0
      %v666 = vadd.f32 0.0, %v665
      %667 = vmatprep.mubr.f32.mxu0 0.0
      %668 = vmatmul.mubr.f32.gmra.mrb[0].mxu0 %v559
      %v669 = vpop.f32.mrb[0].mxu0
      %v670 = vadd.f32 0.0, %v669
      %v671 = vpop.f32.mrb[0].mxu0
      %v672 = vadd.f32 0.0, %v671
      %673 = vdwg.mxu0
      %v675 = vsel %vm536, %v495, 0
      %v678 = vsel %vm536, %v496, 0
      %v681 = vsel %vm536, %v497, 0
      %v684 = vsel %vm536, %v498, 0
      %v687 = vsel %vm536, %v499, 0
      %v690 = vsel %vm536, %v500, 0
      %v693 = vsel %vm536, %v501, 0
      %v696 = vsel %vm536, %v502, 0
      %698 = vmatprep.subr.mxu0 %v504
      %699 = vmatpush1.msra.mxu0 %v503
      %700 = vmatprep.subr.mxu0 %v506
      %701 = vmatpush1.msra.mxu0 %v505
      %702 = vmatprep.subr.mxu0 %v508
      %703 = vmatpush1.msra.mxu0 %v507
      %704 = vmatprep.subr.mxu0 %v510
      %705 = vmatpush1.msra.mxu0 %v509
      %706 = vmatprep.subr.mxu0 %v512
      %707 = vmatpush1.msra.mxu0 %v511
      %708 = vmatprep.subr.mxu0 %v514
      %709 = vmatpush1.msra.mxu0 %v513
      %710 = vmatprep.subr.mxu0 0.0
      %711 = vmatpush1.msra.mxu0 0.0
      %712 = vmatprep.subr.mxu0 0.0
      %713 = vmatpush1.msra.mxu0 0.0
      %714 = vmatprep.subr.mxu0 0.0
      %715 = vmatpush1.msra.mxu0 0.0
      %716 = vmatprep.subr.mxu0 0.0
      %717 = vmatpush1.msra.mxu0 0.0
      %718 = vmatprep.subr.mxu0 0.0
      %719 = vmatpush1.msra.mxu0 0.0
      %720 = vmatprep.subr.mxu0 0.0
      %721 = vmatpush1.msra.mxu0 0.0
      %722 = vmatprep.subr.mxu0 0.0
      %723 = vmatpush1.msra.mxu0 0.0
      %724 = vmatprep.subr.mxu0 0.0
      %725 = vmatpush1.msra.mxu0 0.0
      %726 = vmatprep.subr.mxu0 0.0
      %727 = vmatpush1.msra.mxu0 0.0
      %728 = vmatprep.subr.mxu0 0.0
      %729 = vmatpush1.msra.mxu0 0.0
      %730 = vmatprep.subr.mxu0 0.0
      %731 = vmatpush1.msra.mxu0 0.0
      %732 = vmatprep.subr.mxu0 0.0
      %733 = vmatpush1.msra.mxu0 0.0
      %734 = vmatprep.subr.mxu0 0.0
      %735 = vmatpush1.msra.mxu0 0.0
      %736 = vmatprep.subr.mxu0 0.0
      %737 = vmatpush1.msra.mxu0 0.0
      %738 = vmatprep.subr.mxu0 0.0
      %739 = vmatpush1.msra.mxu0 0.0
      %740 = vmatprep.subr.mxu0 0.0
      %741 = vmatpush1.msra.mxu0 0.0
      %742 = vmatprep.subr.mxu0 0.0
      %743 = vmatpush1.msra.mxu0 0.0
      %744 = vmatprep.subr.mxu0 0.0
      %745 = vmatpush1.msra.mxu0 0.0
      %746 = vmatprep.subr.mxu0 0.0
      %747 = vmatpush1.msra.mxu0 0.0
      %748 = vmatprep.subr.mxu0 0.0
      %749 = vmatpush1.msra.mxu0 0.0
      %750 = vmatprep.subr.mxu0 0.0
      %751 = vmatpush1.msra.mxu0 0.0
      %752 = vmatprep.subr.mxu0 0.0
      %753 = vmatpush1.msra.mxu0 0.0
      %754 = vmatprep.subr.mxu0 0.0
      %755 = vmatpush1.msra.mxu0 0.0
      %756 = vmatprep.subr.mxu0 0.0
      %757 = vmatpush1.msra.mxu0 0.0
      %758 = vmatprep.subr.mxu0 0.0
      %759 = vmatpush1.msra.mxu0 0.0
      %760 = vmatprep.subr.mxu0 0.0
      %761 = vmatpush1.msra.mxu0 0.0
      %762 = vmatprep.mubr.f32.mxu0 0.0
      %763 = vmatmul.mubr.f32.gmra.mrb[0].mxu0 %v675
      %v764 = vpop.f32.mrb[0].mxu0
      %v765 = vadd.f32 %v628, %v764
      %v766 = vpop.f32.mrb[0].mxu0
      %v767 = vadd.f32 %v630, %v766
      %768 = vmatprep.mubr.f32.mxu0 0.0
      %769 = vmatmul.mubr.f32.gmra.mrb[0].mxu0 %v678
      %v770 = vpop.f32.mrb[0].mxu0
      %v771 = vadd.f32 %v634, %v770
      %v772 = vpop.f32.mrb[0].mxu0
      %v773 = vadd.f32 %v636, %v772
      %774 = vmatprep.mubr.f32.mxu0 0.0
      %775 = vmatmul.mubr.f32.gmra.mrb[0].mxu0 %v681
      %v776 = vpop.f32.mrb[0].mxu0
      %v777 = vadd.f32 %v640, %v776
      %v778 = vpop.f32.mrb[0].mxu0
      %v779 = vadd.f32 %v642, %v778
      %780 = vmatprep.mubr.f32.mxu0 0.0
      %781 = vmatmul.mubr.f32.gmra.mrb[0].mxu0 %v684
      %v782 = vpop.f32.mrb[0].mxu0
      %v783 = vadd.f32 %v646, %v782
      %v784 = vpop.f32.mrb[0].mxu0
      %v785 = vadd.f32 %v648, %v784
      %786 = vmatprep.mubr.f32.mxu0 0.0
      %787 = vmatmul.mubr.f32.gmra.mrb[0].mxu0 %v687
      %v788 = vpop.f32.mrb[0].mxu0
      %v789 = vadd.f32 %v652, %v788
      %v790 = vpop.f32.mrb[0].mxu0
      %v791 = vadd.f32 %v654, %v790
      %792 = vmatprep.mubr.f32.mxu0 0.0
      %793 = vmatmul.mubr.f32.gmra.mrb[0].mxu0 %v690
      %v794 = vpop.f32.mrb[0].mxu0
      %v795 = vadd.f32 %v658, %v794
      %v796 = vpop.f32.mrb[0].mxu0
      %v797 = vadd.f32 %v660, %v796
      %798 = vmatprep.mubr.f32.mxu0 0.0
      %799 = vmatmul.mubr.f32.gmra.mrb[0].mxu0 %v693
      %v800 = vpop.f32.mrb[0].mxu0
      %v801 = vadd.f32 %v664, %v800
      %v802 = vpop.f32.mrb[0].mxu0
      %v803 = vadd.f32 %v666, %v802
      %804 = vmatprep.mubr.f32.mxu0 0.0
      %805 = vmatmul.mubr.f32.gmra.mrb[0].mxu0 %v696
      %v806 = vpop.f32.mrb[0].mxu0
      %v807 = vadd.f32 %v670, %v806
      %v808 = vpop.f32.mrb[0].mxu0
      %v809 = vadd.f32 %v672, %v808
      %810 = vdwg.mxu0
      %v811 = vld [vmem:[%s489 + $0x2] sm:$0xff]
      %v812 = vld [vmem:[%s489 + $0xa] sm:$0xff]
      %v813 = vld [vmem:[%s489 + $0x12] sm:$0xff]
      %v814 = vld [vmem:[%s489 + $0x1a] sm:$0xff]
      %v815 = vld [vmem:[%s489 + $0x22] sm:$0xff]
      %v816 = vld [vmem:[%s489 + $0x2a] sm:$0xff]
      %v817 = vld [vmem:[%s489 + $0x32] sm:$0xff]
      %v818 = vld [vmem:[%s489 + $0x3a] sm:$0x3f]
      %s819 = scalar_lea.vmem %s1, 192
      %v820 = vld [vmem:[%s819] sm:$0xff]
      %v821 = vld [vmem:[%s819 + $0x8] sm:$0xff]
      %v822 = vld [vmem:[%s819 + $0x10] sm:$0xff]
      %v823 = vld [vmem:[%s819 + $0x18] sm:$0xff]
      %v824 = vld [vmem:[%s819 + $0x20] sm:$0xff]
      %v825 = vld [vmem:[%s819 + $0x28] sm:$0xff]
      %v826 = vld [vmem:[%s819 + $0x30] sm:$0xff]
      %v827 = vld [vmem:[%s819 + $0x38] sm:$0xff]
      %v828 = vld [vmem:[%s819 + $0x40] sm:$0xff]
      %v829 = vld [vmem:[%s819 + $0x48] sm:$0xff]
      %v830 = vld [vmem:[%s819 + $0x50] sm:$0xff]
      %v831 = vld [vmem:[%s819 + $0x58] sm:$0xff]
      %v833 = vsel %vm536, %v811, 0
      %v836 = vsel %vm536, %v812, 0
      %v839 = vsel %vm536, %v813, 0
      %v842 = vsel %vm536, %v814, 0
      %v845 = vsel %vm536, %v815, 0
      %v848 = vsel %vm536, %v816, 0
      %v851 = vsel %vm536, %v817, 0
      %v854 = vsel %vm536, %v818, 0
      %856 = vmatprep.subr.mxu0 %v821
      %857 = vmatpush1.msra.mxu0 %v820
      %858 = vmatprep.subr.mxu0 %v823
      %859 = vmatpush1.msra.mxu0 %v822
      %860 = vmatprep.subr.mxu0 %v825
      %861 = vmatpush1.msra.mxu0 %v824
      %862 = vmatprep.subr.mxu0 %v827
      %863 = vmatpush1.msra.mxu0 %v826
      %864 = vmatprep.subr.mxu0 %v829
      %865 = vmatpush1.msra.mxu0 %v828
      %866 = vmatprep.subr.mxu0 %v831
      %867 = vmatpush1.msra.mxu0 %v830
      %868 = vmatprep.subr.mxu0 0.0
      %869 = vmatpush1.msra.mxu0 0.0
      %870 = vmatprep.subr.mxu0 0.0
      %871 = vmatpush1.msra.mxu0 0.0
      %872 = vmatprep.subr.mxu0 0.0
      %873 = vmatpush1.msra.mxu0 0.0
      %874 = vmatprep.subr.mxu0 0.0
      %875 = vmatpush1.msra.mxu0 0.0
      %876 = vmatprep.subr.mxu0 0.0
      %877 = vmatpush1.msra.mxu0 0.0
      %878 = vmatprep.subr.mxu0 0.0
      %879 = vmatpush1.msra.mxu0 0.0
      %880 = vmatprep.subr.mxu0 0.0
      %881 = vmatpush1.msra.mxu0 0.0
      %882 = vmatprep.subr.mxu0 0.0
      %883 = vmatpush1.msra.mxu0 0.0
      %884 = vmatprep.subr.mxu0 0.0
      %885 = vmatpush1.msra.mxu0 0.0
      %886 = vmatprep.subr.mxu0 0.0
      %887 = vmatpush1.msra.mxu0 0.0
      %888 = vmatprep.subr.mxu0 0.0
      %889 = vmatpush1.msra.mxu0 0.0
      %890 = vmatprep.subr.mxu0 0.0
      %891 = vmatpush1.msra.mxu0 0.0
      %892 = vmatprep.subr.mxu0 0.0
      %893 = vmatpush1.msra.mxu0 0.0
      %894 = vmatprep.subr.mxu0 0.0
      %895 = vmatpush1.msra.mxu0 0.0
      %896 = vmatprep.subr.mxu0 0.0
      %897 = vmatpush1.msra.mxu0 0.0
      %898 = vmatprep.subr.mxu0 0.0
      %899 = vmatpush1.msra.mxu0 0.0
      %900 = vmatprep.subr.mxu0 0.0
      %901 = vmatpush1.msra.mxu0 0.0
      %902 = vmatprep.subr.mxu0 0.0
      %903 = vmatpush1.msra.mxu0 0.0
      %904 = vmatprep.subr.mxu0 0.0
      %905 = vmatpush1.msra.mxu0 0.0
      %906 = vmatprep.subr.mxu0 0.0
      %907 = vmatpush1.msra.mxu0 0.0
      %908 = vmatprep.subr.mxu0 0.0
      %909 = vmatpush1.msra.mxu0 0.0
      %910 = vmatprep.subr.mxu0 0.0
      %911 = vmatpush1.msra.mxu0 0.0
      %912 = vmatprep.subr.mxu0 0.0
      %913 = vmatpush1.msra.mxu0 0.0
      %914 = vmatprep.subr.mxu0 0.0
      %915 = vmatpush1.msra.mxu0 0.0
      %916 = vmatprep.subr.mxu0 0.0
      %917 = vmatpush1.msra.mxu0 0.0
      %918 = vmatprep.subr.mxu0 0.0
      %919 = vmatpush1.msra.mxu0 0.0
      %920 = vmatprep.mubr.f32.mxu0 0.0
      %921 = vmatmul.mubr.f32.gmra.mrb[0].mxu0 %v833
      %v922 = vpop.f32.mrb[0].mxu0
      %v923 = vadd.f32 0.0, %v922
      %v924 = vpop.f32.mrb[0].mxu0
      %v925 = vadd.f32 0.0, %v924
      %926 = vmatprep.mubr.f32.mxu0 0.0
      %927 = vmatmul.mubr.f32.gmra.mrb[0].mxu0 %v836
      %v928 = vpop.f32.mrb[0].mxu0
      %v929 = vadd.f32 0.0, %v928
      %v930 = vpop.f32.mrb[0].mxu0
      %v931 = vadd.f32 0.0, %v930
      %932 = vmatprep.mubr.f32.mxu0 0.0
      %933 = vmatmul.mubr.f32.gmra.mrb[0].mxu0 %v839
      %v934 = vpop.f32.mrb[0].mxu0
      %v935 = vadd.f32 0.0, %v934
      %v936 = vpop.f32.mrb[0].mxu0
      %v937 = vadd.f32 0.0, %v936
      %938 = vmatprep.mubr.f32.mxu0 0.0
      %939 = vmatmul.mubr.f32.gmra.mrb[0].mxu0 %v842
      %v940 = vpop.f32.mrb[0].mxu0
      %v941 = vadd.f32 0.0, %v940
      %v942 = vpop.f32.mrb[0].mxu0
      %v943 = vadd.f32 0.0, %v942
      %944 = vmatprep.mubr.f32.mxu0 0.0
      %945 = vmatmul.mubr.f32.gmra.mrb[0].mxu0 %v845
      %v946 = vpop.f32.mrb[0].mxu0
      %v947 = vadd.f32 0.0, %v946
      %v948 = vpop.f32.mrb[0].mxu0
      %v949 = vadd.f32 0.0, %v948
      %950 = vmatprep.mubr.f32.mxu0 0.0
      %951 = vmatmul.mubr.f32.gmra.mrb[0].mxu0 %v848
      %v952 = vpop.f32.mrb[0].mxu0
      %v953 = vadd.f32 0.0, %v952
      %v954 = vpop.f32.mrb[0].mxu0
      %v955 = vadd.f32 0.0, %v954
      %956 = vmatprep.mubr.f32.mxu0 0.0
      %957 = vmatmul.mubr.f32.gmra.mrb[0].mxu0 %v851
      %v958 = vpop.f32.mrb[0].mxu0
      %v959 = vadd.f32 0.0, %v958
      %v960 = vpop.f32.mrb[0].mxu0
      %v961 = vadd.f32 0.0, %v960
      %962 = vmatprep.mubr.f32.mxu0 0.0
      %963 = vmatmul.mubr.f32.gmra.mrb[0].mxu0 %v854
      %v964 = vpop.f32.mrb[0].mxu0
      %v965 = vadd.f32 0.0, %v964
      %v966 = vpop.f32.mrb[0].mxu0
      %v967 = vadd.f32 0.0, %v966
      %968 = vdwg.mxu0
      %v969 = vadd.f32 %v765, %v923
      %v970 = vadd.f32 %v767, %v925
      %v971 = vadd.f32 %v771, %v929
      %v972 = vadd.f32 %v773, %v931
      %v973 = vadd.f32 %v777, %v935
      %v974 = vadd.f32 %v779, %v937
      %v975 = vadd.f32 %v783, %v941
      %v976 = vadd.f32 %v785, %v943
      %v977 = vadd.f32 %v789, %v947
      %v978 = vadd.f32 %v791, %v949
      %v979 = vadd.f32 %v795, %v953
      %v980 = vadd.f32 %v797, %v955
      %v981 = vadd.f32 %v801, %v959
      %v982 = vadd.f32 %v803, %v961
      %v983 = vadd.f32 %v807, %v965
      %v984 = vadd.f32 %v809, %v967
      %v985 = vld [vmem:[%s2] sm:$0x3]
      %v987 = vlaneseq
      %v988 = vshrl.u32 %v987, 7
      %v989 = vsub.s32 0, %v988
      %v990 = vrot.slane %v985, %v989
      %v991 = vlaneseq
      %v992 = vshrl.u32 %v991, 7
      %v993 = vsub.s32 1, %v992
      %v994 = vrot.slane %v985, %v993
      %v997 = vadd.f32 %v969, %v990
      %v998 = vadd.f32 %v970, %v994
      %v999 = vadd.f32 %v971, %v990
      %v1000 = vadd.f32 %v972, %v994
      %v1001 = vadd.f32 %v973, %v990
      %v1002 = vadd.f32 %v974, %v994
      %v1003 = vadd.f32 %v975, %v990
      %v1004 = vadd.f32 %v976, %v994
      %v1005 = vadd.f32 %v977, %v990
      %v1006 = vadd.f32 %v978, %v994
      %v1007 = vadd.f32 %v979, %v990
      %v1008 = vadd.f32 %v980, %v994
      %v1009 = vadd.f32 %v981, %v990
      %v1010 = vadd.f32 %v982, %v994
      %v1011 = vadd.f32 %v983, %v990
      %v1012 = vadd.f32 %v984, %v994
      %v1013 = vmax.f32 %v997, 0.0
      %v1014 = vmax.f32 %v998, 0.0
      %v1015 = vmax.f32 %v999, 0.0
      %v1016 = vmax.f32 %v1000, 0.0
      %v1017 = vmax.f32 %v1001, 0.0
      %v1018 = vmax.f32 %v1002, 0.0
      %v1019 = vmax.f32 %v1003, 0.0
      %v1020 = vmax.f32 %v1004, 0.0
      %v1021 = vmax.f32 %v1005, 0.0
      %v1022 = vmax.f32 %v1006, 0.0
      %v1023 = vmax.f32 %v1007, 0.0
      %v1024 = vmax.f32 %v1008, 0.0
      %v1025 = vmax.f32 %v1009, 0.0
      %v1026 = vmax.f32 %v1010, 0.0
      %v1027 = vmax.f32 %v1011, 0.0
      %v1028 = vmax.f32 %v1012, 0.0
      %v1029 = vld [vmem:[%s3] sm:$0xff]
      %v1030 = vld [vmem:[%s3 + $0x8] sm:$0xff]
      %v1031 = vld [vmem:[%s3 + $0x10] sm:$0xff]
      %v1032 = vld [vmem:[%s3 + $0x18] sm:$0xff]
      %v1033 = vld [vmem:[%s3 + $0x20] sm:$0xff]
      %v1034 = vld [vmem:[%s3 + $0x28] sm:$0xff]
      %v1035 = vld [vmem:[%s3 + $0x30] sm:$0xff]
      %v1036 = vld [vmem:[%s3 + $0x38] sm:$0xff]
      %v1037 = vld [vmem:[%s3 + $0x40] sm:$0xff]
      %v1038 = vld [vmem:[%s3 + $0x48] sm:$0xff]
      %v1039 = vld [vmem:[%s3 + $0x50] sm:$0xff]
      %v1040 = vld [vmem:[%s3 + $0x58] sm:$0xff]
      %v1041 = vld [vmem:[%s3 + $0x60] sm:$0xff]
      %v1042 = vld [vmem:[%s3 + $0x68] sm:$0xff]
      %v1043 = vld [vmem:[%s3 + $0x70] sm:$0xff]
      %v1044 = vld [vmem:[%s3 + $0x78] sm:$0xff]
      %v1045 = vld [vmem:[%s3 + $0x80] sm:$0xff]
      %v1046 = vld [vmem:[%s3 + $0x88] sm:$0xff]
      %v1047 = vld [vmem:[%s3 + $0x90] sm:$0xff]
      %v1048 = vld [vmem:[%s3 + $0x98] sm:$0xff]
      %v1049 = vld [vmem:[%s3 + $0xa0] sm:$0xff]
      %v1050 = vld [vmem:[%s3 + $0xa8] sm:$0xff]
      %v1051 = vld [vmem:[%s3 + $0xb0] sm:$0xff]
      %v1052 = vld [vmem:[%s3 + $0xb8] sm:$0xff]
      %v1053 = vld [vmem:[%s3 + $0xc0] sm:$0xff]
      %v1054 = vld [vmem:[%s3 + $0xc8] sm:$0xff]
      %v1055 = vld [vmem:[%s3 + $0xd0] sm:$0xff]
      %v1056 = vld [vmem:[%s3 + $0xd8] sm:$0xff]
      %v1057 = vld [vmem:[%s3 + $0xe0] sm:$0xff]
      %v1058 = vld [vmem:[%s3 + $0xe8] sm:$0xff]
      %v1059 = vld [vmem:[%s3 + $0xf0] sm:$0xff]
      %v1060 = vld [vmem:[%s3 + $0xf8] sm:$0xff]
      %v1061 = vld [vmem:[%s3 + $0x100] sm:$0xff]
      %v1062 = vld [vmem:[%s3 + $0x108] sm:$0xff]
      %v1063 = vld [vmem:[%s3 + $0x110] sm:$0xf]
      %v1064 = vld [vmem:[%s3 + $0x118] sm:$0xf]
      %v1065 = vld [vmem:[%s4] sm:$0x3]
      %v1067 = vlaneseq
      %v1068 = vshrl.u32 %v1067, 7
      %v1069 = vsub.s32 0, %v1068
      %v1070 = vrot.slane %v1065, %v1069
      %v1071 = vlaneseq
      %v1072 = vshrl.u32 %v1071, 7
      %v1073 = vsub.s32 1, %v1072
      %v1074 = vrot.slane %v1065, %v1073
      %vm1077 = vcmask 97280
      %v1079 = vsel %vm1077, %v1014, 0
      %v1082 = vsel %vm1077, %v1016, 0
      %v1085 = vsel %vm1077, %v1018, 0
      %v1088 = vsel %vm1077, %v1020, 0
      %v1091 = vsel %vm1077, %v1022, 0
      %v1094 = vsel %vm1077, %v1024, 0
      %v1097 = vsel %vm1077, %v1026, 0
      %v1100 = vsel %vm1077, %v1028, 0
      %vm1102 = vcmask 1043456
      %v1104 = vsel %vm1102, %v1063, 0
      %v1107 = vsel %vm1102, %v1064, 0
      %1109 = vmatprep.subr.mxu0 %v1030
      %1110 = vmatpush1.msra.mxu0 %v1029
      %1111 = vmatprep.subr.mxu0 %v1032
      %1112 = vmatpush1.msra.mxu0 %v1031
      %1113 = vmatprep.subr.mxu0 %v1034
      %1114 = vmatpush1.msra.mxu0 %v1033
      %1115 = vmatprep.subr.mxu0 %v1036
      %1116 = vmatpush1.msra.mxu0 %v1035
      %1117 = vmatprep.subr.mxu0 %v1038
      %1118 = vmatpush1.msra.mxu0 %v1037
      %1119 = vmatprep.subr.mxu0 %v1040
      %1120 = vmatpush1.msra.mxu0 %v1039
      %1121 = vmatprep.subr.mxu0 %v1042
      %1122 = vmatpush1.msra.mxu0 %v1041
      %1123 = vmatprep.subr.mxu0 %v1044
      %1124 = vmatpush1.msra.mxu0 %v1043
      %1125 = vmatprep.subr.mxu0 %v1046
      %1126 = vmatpush1.msra.mxu0 %v1045
      %1127 = vmatprep.subr.mxu0 %v1048
      %1128 = vmatpush1.msra.mxu0 %v1047
      %1129 = vmatprep.subr.mxu0 %v1050
      %1130 = vmatpush1.msra.mxu0 %v1049
      %1131 = vmatprep.subr.mxu0 %v1052
      %1132 = vmatpush1.msra.mxu0 %v1051
      %1133 = vmatprep.subr.mxu0 %v1054
      %1134 = vmatpush1.msra.mxu0 %v1053
      %1135 = vmatprep.subr.mxu0 %v1056
      %1136 = vmatpush1.msra.mxu0 %v1055
      %1137 = vmatprep.subr.mxu0 %v1058
      %1138 = vmatpush1.msra.mxu0 %v1057
      %1139 = vmatprep.subr.mxu0 %v1060
      %1140 = vmatpush1.msra.mxu0 %v1059
      %1141 = vmatprep.subr.mxu0 %v1062
      %1142 = vmatpush1.msra.mxu0 %v1061
      %1143 = vmatprep.subr.mxu0 %v1107
      %1144 = vmatpush1.msra.mxu0 %v1104
      %1145 = vmatprep.subr.mxu0 0.0
      %1146 = vmatpush1.msra.mxu0 0.0
      %1147 = vmatprep.subr.mxu0 0.0
      %1148 = vmatpush1.msra.mxu0 0.0
      %1149 = vmatprep.subr.mxu0 0.0
      %1150 = vmatpush1.msra.mxu0 0.0
      %1151 = vmatprep.subr.mxu0 0.0
      %1152 = vmatpush1.msra.mxu0 0.0
      %1153 = vmatprep.subr.mxu0 0.0
      %1154 = vmatpush1.msra.mxu0 0.0
      %1155 = vmatprep.subr.mxu0 0.0
      %1156 = vmatpush1.msra.mxu0 0.0
      %1157 = vmatprep.subr.mxu0 0.0
      %1158 = vmatpush1.msra.mxu0 0.0
      %1159 = vmatprep.subr.mxu0 0.0
      %1160 = vmatpush1.msra.mxu0 0.0
      %1161 = vmatprep.subr.mxu0 0.0
      %1162 = vmatpush1.msra.mxu0 0.0
      %1163 = vmatprep.subr.mxu0 0.0
      %1164 = vmatpush1.msra.mxu0 0.0
      %1165 = vmatprep.subr.mxu0 0.0
      %1166 = vmatpush1.msra.mxu0 0.0
      %1167 = vmatprep.subr.mxu0 0.0
      %1168 = vmatpush1.msra.mxu0 0.0
      %1169 = vmatprep.subr.mxu0 0.0
      %1170 = vmatpush1.msra.mxu0 0.0
      %1171 = vmatprep.subr.mxu0 0.0
      %1172 = vmatpush1.msra.mxu0 0.0
      %1173 = vmatprep.mubr.f32.mxu0 %v1079
      %1174 = vmatmul.mubr.f32.gmra.mrb[0].mxu0 %v1013
      %v1175 = vpop.f32.mrb[0].mxu0
      %v1176 = vadd.f32 %v1070, %v1175
      %v1177 = vpop.f32.mrb[0].mxu0
      %v1178 = vadd.f32 %v1074, %v1177
      %1179 = vmatprep.mubr.f32.mxu0 %v1082
      %1180 = vmatmul.mubr.f32.gmra.mrb[0].mxu0 %v1015
      %v1181 = vpop.f32.mrb[0].mxu0
      %v1182 = vadd.f32 %v1070, %v1181
      %v1183 = vpop.f32.mrb[0].mxu0
      %v1184 = vadd.f32 %v1074, %v1183
      %1185 = vmatprep.mubr.f32.mxu0 %v1085
      %1186 = vmatmul.mubr.f32.gmra.mrb[0].mxu0 %v1017
      %v1187 = vpop.f32.mrb[0].mxu0
      %v1188 = vadd.f32 %v1070, %v1187
      %v1189 = vpop.f32.mrb[0].mxu0
      %v1190 = vadd.f32 %v1074, %v1189
      %1191 = vmatprep.mubr.f32.mxu0 %v1088
      %1192 = vmatmul.mubr.f32.gmra.mrb[0].mxu0 %v1019
      %v1193 = vpop.f32.mrb[0].mxu0
      %v1194 = vadd.f32 %v1070, %v1193
      %v1195 = vpop.f32.mrb[0].mxu0
      %v1196 = vadd.f32 %v1074, %v1195
      %1197 = vmatprep.mubr.f32.mxu0 %v1091
      %1198 = vmatmul.mubr.f32.gmra.mrb[0].mxu0 %v1021
      %v1199 = vpop.f32.mrb[0].mxu0
      %v1200 = vadd.f32 %v1070, %v1199
      %v1201 = vpop.f32.mrb[0].mxu0
      %v1202 = vadd.f32 %v1074, %v1201
      %1203 = vmatprep.mubr.f32.mxu0 %v1094
      %1204 = vmatmul.mubr.f32.gmra.mrb[0].mxu0 %v1023
      %v1205 = vpop.f32.mrb[0].mxu0
      %v1206 = vadd.f32 %v1070, %v1205
      %v1207 = vpop.f32.mrb[0].mxu0
      %v1208 = vadd.f32 %v1074, %v1207
      %1209 = vmatprep.mubr.f32.mxu0 %v1097
      %1210 = vmatmul.mubr.f32.gmra.mrb[0].mxu0 %v1025
      %v1211 = vpop.f32.mrb[0].mxu0
      %v1212 = vadd.f32 %v1070, %v1211
      %v1213 = vpop.f32.mrb[0].mxu0
      %v1214 = vadd.f32 %v1074, %v1213
      %1215 = vmatprep.mubr.f32.mxu0 %v1100
      %1216 = vmatmul.mubr.f32.gmra.mrb[0].mxu0 %v1027
      %v1217 = vpop.f32.mrb[0].mxu0
      %v1218 = vadd.f32 %v1070, %v1217
      %v1219 = vpop.f32.mrb[0].mxu0
      %v1220 = vadd.f32 %v1074, %v1219
      %1221 = vdwg.mxu0
      %v1222 = vmax.f32 %v1176, 0.0
      %v1223 = vmax.f32 %v1178, 0.0
      %v1224 = vmax.f32 %v1182, 0.0
      %v1225 = vmax.f32 %v1184, 0.0
      %v1226 = vmax.f32 %v1188, 0.0
      %v1227 = vmax.f32 %v1190, 0.0
      %v1228 = vmax.f32 %v1194, 0.0
      %v1229 = vmax.f32 %v1196, 0.0
      %v1230 = vmax.f32 %v1200, 0.0
      %v1231 = vmax.f32 %v1202, 0.0
      %v1232 = vmax.f32 %v1206, 0.0
      %v1233 = vmax.f32 %v1208, 0.0
      %v1234 = vmax.f32 %v1212, 0.0
      %v1235 = vmax.f32 %v1214, 0.0
      %v1236 = vmax.f32 %v1218, 0.0
      %v1237 = vmax.f32 %v1220, 0.0
      %v1238 = vld [vmem:[%s5] sm:$0xff]
      %v1239 = vld [vmem:[%s5 + $0x8] sm:$0xff]
      %v1240 = vld [vmem:[%s5 + $0x10] sm:$0xff]
      %v1241 = vld [vmem:[%s5 + $0x18] sm:$0xf]
      %vm1242 = vcmask 506880
      %v1244 = vsel %vm1242, %v1238, 0
      %v1247 = vsel %vm1242, %v1239, 0
      %v1250 = vsel %vm1242, %v1240, 0
      %v1253 = vsel %vm1242, %v1241, 0
      %vm1255 = vcmask 1045504
      %v1257 = vsel %vm1255, %v1236, 0
      %v1260 = vsel %vm1255, %v1237, 0
      %1262 = vmatprep.subr.mxu0 %v1223
      %1263 = vmatpush1.msra.mxu0 %v1222
      %1264 = vmatprep.subr.mxu0 %v1225
      %1265 = vmatpush1.msra.mxu0 %v1224
      %1266 = vmatprep.subr.mxu0 %v1227
      %1267 = vmatpush1.msra.mxu0 %v1226
      %1268 = vmatprep.subr.mxu0 %v1229
      %1269 = vmatpush1.msra.mxu0 %v1228
      %1270 = vmatprep.subr.mxu0 %v1231
      %1271 = vmatpush1.msra.mxu0 %v1230
      %1272 = vmatprep.subr.mxu0 %v1233
      %1273 = vmatpush1.msra.mxu0 %v1232
      %1274 = vmatprep.subr.mxu0 %v1235
      %1275 = vmatpush1.msra.mxu0 %v1234
      %1276 = vmatprep.subr.mxu0 %v1260
      %1277 = vmatpush1.msra.mxu0 %v1257
      %1278 = vmatprep.subr.mxu0 0.0
      %1279 = vmatpush1.msra.mxu0 0.0
      %1280 = vmatprep.subr.mxu0 0.0
      %1281 = vmatpush1.msra.mxu0 0.0
      %1282 = vmatprep.subr.mxu0 0.0
      %1283 = vmatpush1.msra.mxu0 0.0
      %1284 = vmatprep.subr.mxu0 0.0
      %1285 = vmatpush1.msra.mxu0 0.0
      %1286 = vmatprep.subr.mxu0 0.0
      %1287 = vmatpush1.msra.mxu0 0.0
      %1288 = vmatprep.subr.mxu0 0.0
      %1289 = vmatpush1.msra.mxu0 0.0
      %1290 = vmatprep.subr.mxu0 0.0
      %1291 = vmatpush1.msra.mxu0 0.0
      %1292 = vmatprep.subr.mxu0 0.0
      %1293 = vmatpush1.msra.mxu0 0.0
      %1294 = vmatprep.subr.mxu0 0.0
      %1295 = vmatpush1.msra.mxu0 0.0
      %1296 = vmatprep.subr.mxu0 0.0
      %1297 = vmatpush1.msra.mxu0 0.0
      %1298 = vmatprep.subr.mxu0 0.0
      %1299 = vmatpush1.msra.mxu0 0.0
      %1300 = vmatprep.subr.mxu0 0.0
      %1301 = vmatpush1.msra.mxu0 0.0
      %1302 = vmatprep.subr.mxu0 0.0
      %1303 = vmatpush1.msra.mxu0 0.0
      %1304 = vmatprep.subr.mxu0 0.0
      %1305 = vmatpush1.msra.mxu0 0.0
      %1306 = vmatprep.subr.mxu0 0.0
      %1307 = vmatpush1.msra.mxu0 0.0
      %1308 = vmatprep.subr.mxu0 0.0
      %1309 = vmatpush1.msra.mxu0 0.0
      %1310 = vmatprep.subr.mxu0 0.0
      %1311 = vmatpush1.msra.mxu0 0.0
      %1312 = vmatprep.subr.mxu0 0.0
      %1313 = vmatpush1.msra.mxu0 0.0
      %1314 = vmatprep.subr.mxu0 0.0
      %1315 = vmatpush1.msra.mxu0 0.0
      %1316 = vmatprep.subr.mxu0 0.0
      %1317 = vmatpush1.msra.mxu0 0.0
      %1318 = vmatprep.subr.mxu0 0.0
      %1319 = vmatpush1.msra.mxu0 0.0
      %1320 = vmatprep.subr.mxu0 0.0
      %1321 = vmatpush1.msra.mxu0 0.0
      %1322 = vmatprep.subr.mxu0 0.0
      %1323 = vmatpush1.msra.mxu0 0.0
      %1324 = vmatprep.subr.mxu0 0.0
      %1325 = vmatpush1.msra.mxu0 0.0
      %1326 = vmatprep.mubr.f32.mxu0 0.0
      %1327 = vmatmul.mubr.f32.gmra.mrb[0].mxu0 %v1244
      %v1328 = vpop.f32.mrb[0].mxu0
      %v1329 = vadd.f32 0.0, %v1328
      %v1330 = vpop.f32.mrb[0].mxu0
      %v1331 = vadd.f32 0.0, %v1330
      %1332 = vmatprep.mubr.f32.mxu0 0.0
      %1333 = vmatmul.mubr.f32.gmra.mrb[0].mxu0 %v1247
      %v1334 = vpop.f32.mrb[0].mxu0
      %v1335 = vadd.f32 0.0, %v1334
      %v1336 = vpop.f32.mrb[0].mxu0
      %v1337 = vadd.f32 0.0, %v1336
      %1338 = vmatprep.mubr.f32.mxu0 0.0
      %1339 = vmatmul.mubr.f32.gmra.mrb[0].mxu0 %v1250
      %v1340 = vpop.f32.mrb[0].mxu0
      %v1341 = vadd.f32 0.0, %v1340
      %v1342 = vpop.f32.mrb[0].mxu0
      %v1343 = vadd.f32 0.0, %v1342
      %1344 = vmatprep.mubr.f32.mxu0 0.0
      %1345 = vmatmul.mubr.f32.gmra.mrb[0].mxu0 %v1253
      %v1346 = vpop.f32.mrb[0].mxu0
      %v1347 = vadd.f32 0.0, %v1346
      %v1348 = vpop.f32.mrb[0].mxu0
      %v1349 = vadd.f32 0.0, %v1348
      %1350 = vdwg.mxu0
      %s1351 = scalar_lea.vmem %s5, 32
      %v1352 = vld [vmem:[%s1351] sm:$0xff]
      %v1353 = vld [vmem:[%s1351 + $0x8] sm:$0xff]
      %v1354 = vld [vmem:[%s1351 + $0x10] sm:$0xff]
      %v1355 = vld [vmem:[%s1351 + $0x18] sm:$0xf]
      %v1357 = vsel %vm1242, %v1352, 0
      %v1360 = vsel %vm1242, %v1353, 0
      %v1363 = vsel %vm1242, %v1354, 0
      %v1366 = vsel %vm1242, %v1355, 0
      %1368 = vmatprep.subr.mxu0 %v1223
      %1369 = vmatpush1.msra.mxu0 %v1222
      %1370 = vmatprep.subr.mxu0 %v1225
      %1371 = vmatpush1.msra.mxu0 %v1224
      %1372 = vmatprep.subr.mxu0 %v1227
      %1373 = vmatpush1.msra.mxu0 %v1226
      %1374 = vmatprep.subr.mxu0 %v1229
      %1375 = vmatpush1.msra.mxu0 %v1228
      %1376 = vmatprep.subr.mxu0 %v1231
      %1377 = vmatpush1.msra.mxu0 %v1230
      %1378 = vmatprep.subr.mxu0 %v1233
      %1379 = vmatpush1.msra.mxu0 %v1232
      %1380 = vmatprep.subr.mxu0 %v1235
      %1381 = vmatpush1.msra.mxu0 %v1234
      %1382 = vmatprep.subr.mxu0 %v1260
      %1383 = vmatpush1.msra.mxu0 %v1257
      %1384 = vmatprep.subr.mxu0 0.0
      %1385 = vmatpush1.msra.mxu0 0.0
      %1386 = vmatprep.subr.mxu0 0.0
      %1387 = vmatpush1.msra.mxu0 0.0
      %1388 = vmatprep.subr.mxu0 0.0
      %1389 = vmatpush1.msra.mxu0 0.0
      %1390 = vmatprep.subr.mxu0 0.0
      %1391 = vmatpush1.msra.mxu0 0.0
      %1392 = vmatprep.subr.mxu0 0.0
      %1393 = vmatpush1.msra.mxu0 0.0
      %1394 = vmatprep.subr.mxu0 0.0
      %1395 = vmatpush1.msra.mxu0 0.0
      %1396 = vmatprep.subr.mxu0 0.0
      %1397 = vmatpush1.msra.mxu0 0.0
      %1398 = vmatprep.subr.mxu0 0.0
      %1399 = vmatpush1.msra.mxu0 0.0
      %1400 = vmatprep.subr.mxu0 0.0
      %1401 = vmatpush1.msra.mxu0 0.0
      %1402 = vmatprep.subr.mxu0 0.0
      %1403 = vmatpush1.msra.mxu0 0.0
      %1404 = vmatprep.subr.mxu0 0.0
      %1405 = vmatpush1.msra.mxu0 0.0
      %1406 = vmatprep.subr.mxu0 0.0
      %1407 = vmatpush1.msra.mxu0 0.0
      %1408 = vmatprep.subr.mxu0 0.0
      %1409 = vmatpush1.msra.mxu0 0.0
      %1410 = vmatprep.subr.mxu0 0.0
      %1411 = vmatpush1.msra.mxu0 0.0
      %1412 = vmatprep.subr.mxu0 0.0
      %1413 = vmatpush1.msra.mxu0 0.0
      %1414 = vmatprep.subr.mxu0 0.0
      %1415 = vmatpush1.msra.mxu0 0.0
      %1416 = vmatprep.subr.mxu0 0.0
      %1417 = vmatpush1.msra.mxu0 0.0
      %1418 = vmatprep.subr.mxu0 0.0
      %1419 = vmatpush1.msra.mxu0 0.0
      %1420 = vmatprep.subr.mxu0 0.0
      %1421 = vmatpush1.msra.mxu0 0.0
      %1422 = vmatprep.subr.mxu0 0.0
      %1423 = vmatpush1.msra.mxu0 0.0
      %1424 = vmatprep.subr.mxu0 0.0
      %1425 = vmatpush1.msra.mxu0 0.0
      %1426 = vmatprep.subr.mxu0 0.0
      %1427 = vmatpush1.msra.mxu0 0.0
      %1428 = vmatprep.subr.mxu0 0.0
      %1429 = vmatpush1.msra.mxu0 0.0
      %1430 = vmatprep.subr.mxu0 0.0
      %1431 = vmatpush1.msra.mxu0 0.0
      %1432 = vmatprep.mubr.f32.mxu0 0.0
      %1433 = vmatmul.mubr.f32.gmra.mrb[0].mxu0 %v1357
      %v1434 = vpop.f32.mrb[0].mxu0
      %v1435 = vadd.f32 0.0, %v1434
      %v1436 = vpop.f32.mrb[0].mxu0
      %v1437 = vadd.f32 0.0, %v1436
      %1438 = vmatprep.mubr.f32.mxu0 0.0
      %1439 = vmatmul.mubr.f32.gmra.mrb[0].mxu0 %v1360
      %v1440 = vpop.f32.mrb[0].mxu0
      %v1441 = vadd.f32 0.0, %v1440
      %v1442 = vpop.f32.mrb[0].mxu0
      %v1443 = vadd.f32 0.0, %v1442
      %1444 = vmatprep.mubr.f32.mxu0 0.0
      %1445 = vmatmul.mubr.f32.gmra.mrb[0].mxu0 %v1363
      %v1446 = vpop.f32.mrb[0].mxu0
      %v1447 = vadd.f32 0.0, %v1446
      %v1448 = vpop.f32.mrb[0].mxu0
      %v1449 = vadd.f32 0.0, %v1448
      %1450 = vmatprep.mubr.f32.mxu0 0.0
      %1451 = vmatmul.mubr.f32.gmra.mrb[0].mxu0 %v1366
      %v1452 = vpop.f32.mrb[0].mxu0
      %v1453 = vadd.f32 0.0, %v1452
      %v1454 = vpop.f32.mrb[0].mxu0
      %v1455 = vadd.f32 0.0, %v1454
      %1456 = vdwg.mxu0
      %v1457 = vmax.f32 %v1329, %v1435
      %v1458 = vmax.f32 %v1331, %v1437
      %v1459 = vmax.f32 %v1335, %v1441
      %v1460 = vmax.f32 %v1337, %v1443
      %v1461 = vmax.f32 %v1341, %v1447
      %v1462 = vmax.f32 %v1343, %v1449
      %v1463 = vmax.f32 %v1347, %v1453
      %v1464 = vmax.f32 %v1349, %v1455
      %v1465 = vld [vmem:[%s6] sm:$0xff]
      %v1466 = vld [vmem:[%s6 + $0x8] sm:$0xff]
      %v1467 = vld [vmem:[%s6 + $0x10] sm:$0xff]
      %v1468 = vld [vmem:[%s6 + $0x18] sm:$0xff]
      %v1469 = vld [vmem:[%s6 + $0x20] sm:$0xff]
      %v1470 = vld [vmem:[%s6 + $0x28] sm:$0xff]
      %v1471 = vld [vmem:[%s6 + $0x30] sm:$0xff]
      %v1472 = vld [vmem:[%s6 + $0x38] sm:$0xff]
      %v1473 = vld [vmem:[%s6 + $0x40] sm:$0xff]
      %v1474 = vld [vmem:[%s6 + $0x48] sm:$0xff]
      %v1475 = vld [vmem:[%s6 + $0x50] sm:$0xff]
      %v1476 = vld [vmem:[%s6 + $0x58] sm:$0xff]
      %v1477 = vld [vmem:[%s6 + $0x60] sm:$0xff]
      %v1478 = vld [vmem:[%s6 + $0x68] sm:$0xff]
      %v1479 = vld [vmem:[%s6 + $0x70] sm:$0xff]
      %v1480 = vld [vmem:[%s6 + $0x78] sm:$0xff]
      %v1481 = vld [vmem:[%s6 + $0x80] sm:$0xff]
      %v1482 = vld [vmem:[%s6 + $0x88] sm:$0xf]
      %v1484 = vsel %vm1077, %v1458, 0
      %v1487 = vsel %vm1077, %v1460, 0
      %v1490 = vsel %vm1077, %v1462, 0
      %v1493 = vsel %vm1077, %v1464, 0
      %v1496 = vsel %vm1102, %v1482, 0
      %1498 = vmatprep.subr.mxu0 0.0
      %1499 = vmatpush1.msra.mxu0 %v1465
      %1500 = vmatprep.subr.mxu0 0.0
      %1501 = vmatpush1.msra.mxu0 %v1466
      %1502 = vmatprep.subr.mxu0 0.0
      %1503 = vmatpush1.msra.mxu0 %v1467
      %1504 = vmatprep.subr.mxu0 0.0
      %1505 = vmatpush1.msra.mxu0 %v1468
      %1506 = vmatprep.subr.mxu0 0.0
      %1507 = vmatpush1.msra.mxu0 %v1469
      %1508 = vmatprep.subr.mxu0 0.0
      %1509 = vmatpush1.msra.mxu0 %v1470
      %1510 = vmatprep.subr.mxu0 0.0
      %1511 = vmatpush1.msra.mxu0 %v1471
      %1512 = vmatprep.subr.mxu0 0.0
      %1513 = vmatpush1.msra.mxu0 %v1472
      %1514 = vmatprep.subr.mxu0 0.0
      %1515 = vmatpush1.msra.mxu0 %v1473
      %1516 = vmatprep.subr.mxu0 0.0
      %1517 = vmatpush1.msra.mxu0 %v1474
      %1518 = vmatprep.subr.mxu0 0.0
      %1519 = vmatpush1.msra.mxu0 %v1475
      %1520 = vmatprep.subr.mxu0 0.0
      %1521 = vmatpush1.msra.mxu0 %v1476
      %1522 = vmatprep.subr.mxu0 0.0
      %1523 = vmatpush1.msra.mxu0 %v1477
      %1524 = vmatprep.subr.mxu0 0.0
      %1525 = vmatpush1.msra.mxu0 %v1478
      %1526 = vmatprep.subr.mxu0 0.0
      %1527 = vmatpush1.msra.mxu0 %v1479
      %1528 = vmatprep.subr.mxu0 0.0
      %1529 = vmatpush1.msra.mxu0 %v1480
      %1530 = vmatprep.subr.mxu0 0.0
      %1531 = vmatpush1.msra.mxu0 %v1481
      %1532 = vmatprep.subr.mxu0 0.0
      %1533 = vmatpush1.msra.mxu0 %v1496
      %1534 = vmatprep.subr.mxu0 0.0
      %1535 = vmatpush1.msra.mxu0 0.0
      %1536 = vmatprep.subr.mxu0 0.0
      %1537 = vmatpush1.msra.mxu0 0.0
      %1538 = vmatprep.subr.mxu0 0.0
      %1539 = vmatpush1.msra.mxu0 0.0
      %1540 = vmatprep.subr.mxu0 0.0
      %1541 = vmatpush1.msra.mxu0 0.0
      %1542 = vmatprep.subr.mxu0 0.0
      %1543 = vmatpush1.msra.mxu0 0.0
      %1544 = vmatprep.subr.mxu0 0.0
      %1545 = vmatpush1.msra.mxu0 0.0
      %1546 = vmatprep.subr.mxu0 0.0
      %1547 = vmatpush1.msra.mxu0 0.0
      %1548 = vmatprep.subr.mxu0 0.0
      %1549 = vmatpush1.msra.mxu0 0.0
      %1550 = vmatprep.subr.mxu0 0.0
      %1551 = vmatpush1.msra.mxu0 0.0
      %1552 = vmatprep.subr.mxu0 0.0
      %1553 = vmatpush1.msra.mxu0 0.0
      %1554 = vmatprep.subr.mxu0 0.0
      %1555 = vmatpush1.msra.mxu0 0.0
      %1556 = vmatprep.subr.mxu0 0.0
      %1557 = vmatpush1.msra.mxu0 0.0
      %1558 = vmatprep.subr.mxu0 0.0
      %1559 = vmatpush1.msra.mxu0 0.0
      %1560 = vmatprep.subr.mxu0 0.0
      %1561 = vmatpush1.msra.mxu0 0.0
      %1562 = vmatprep.mubr.f32.mxu0 %v1484
      %1563 = vmatmul.mubr.f32.gmra.mrb[0].mxu0 %v1457
      %v1564 = vpop.f32.mrb[0].mxu0
      %v1565 = vadd.f32 0.0, %v1564
      %v1566 = vpop.f32.mrb[0].mxu0
      %1567 = vmatprep.mubr.f32.mxu0 %v1487
      %1568 = vmatmul.mubr.f32.gmra.mrb[0].mxu0 %v1459
      %v1569 = vpop.f32.mrb[0].mxu0
      %v1570 = vadd.f32 0.0, %v1569
      %v1571 = vpop.f32.mrb[0].mxu0
      %1572 = vmatprep.mubr.f32.mxu0 %v1490
      %1573 = vmatmul.mubr.f32.gmra.mrb[0].mxu0 %v1461
      %v1574 = vpop.f32.mrb[0].mxu0
      %v1575 = vadd.f32 0.0, %v1574
      %v1576 = vpop.f32.mrb[0].mxu0
      %1577 = vmatprep.mubr.f32.mxu0 %v1493
      %1578 = vmatmul.mubr.f32.gmra.mrb[0].mxu0 %v1463
      %v1579 = vpop.f32.mrb[0].mxu0
      %v1580 = vadd.f32 0.0, %v1579
      %v1581 = vpop.f32.mrb[0].mxu0
      %1582 = vdwg.mxu0
      %s1583 = scalar_lea.vmem %s6, 144
      %v1584 = vld [vmem:[%s1583] sm:$0xff]
      %v1585 = vld [vmem:[%s1583 + $0x8] sm:$0xff]
      %v1586 = vld [vmem:[%s1583 + $0x10] sm:$0xff]
      %v1587 = vld [vmem:[%s1583 + $0x18] sm:$0xff]
      %v1588 = vld [vmem:[%s1583 + $0x20] sm:$0xff]
      %v1589 = vld [vmem:[%s1583 + $0x28] sm:$0xff]
      %v1590 = vld [vmem:[%s1583 + $0x30] sm:$0xff]
      %v1591 = vld [vmem:[%s1583 + $0x38] sm:$0xff]
      %v1592 = vld [vmem:[%s1583 + $0x40] sm:$0xff]
      %v1593 = vld [vmem:[%s1583 + $0x48] sm:$0xff]
      %v1594 = vld [vmem:[%s1583 + $0x50] sm:$0xff]
      %v1595 = vld [vmem:[%s1583 + $0x58] sm:$0xff]
      %v1596 = vld [vmem:[%s1583 + $0x60] sm:$0xff]
      %v1597 = vld [vmem:[%s1583 + $0x68] sm:$0xff]
      %v1598 = vld [vmem:[%s1583 + $0x70] sm:$0xff]
      %v1599 = vld [vmem:[%s1583 + $0x78] sm:$0xff]
      %v1600 = vld [vmem:[%s1583 + $0x80] sm:$0xff]
      %v1601 = vld [vmem:[%s1583 + $0x88] sm:$0xf]
      %v1603 = vsel %vm1102, %v1601, 0
      %1605 = vmatprep.subr.mxu0 0.0
      %1606 = vmatpush1.msra.mxu0 %v1584
      %1607 = vmatprep.subr.mxu0 0.0
      %1608 = vmatpush1.msra.mxu0 %v1585
      %1609 = vmatprep.subr.mxu0 0.0
      %1610 = vmatpush1.msra.mxu0 %v1586
      %1611 = vmatprep.subr.mxu0 0.0
      %1612 = vmatpush1.msra.mxu0 %v1587
      %1613 = vmatprep.subr.mxu0 0.0
      %1614 = vmatpush1.msra.mxu0 %v1588
      %1615 = vmatprep.subr.mxu0 0.0
      %1616 = vmatpush1.msra.mxu0 %v1589
      %1617 = vmatprep.subr.mxu0 0.0
      %1618 = vmatpush1.msra.mxu0 %v1590
      %1619 = vmatprep.subr.mxu0 0.0
      %1620 = vmatpush1.msra.mxu0 %v1591
      %1621 = vmatprep.subr.mxu0 0.0
      %1622 = vmatpush1.msra.mxu0 %v1592
      %1623 = vmatprep.subr.mxu0 0.0
      %1624 = vmatpush1.msra.mxu0 %v1593
      %1625 = vmatprep.subr.mxu0 0.0
      %1626 = vmatpush1.msra.mxu0 %v1594
      %1627 = vmatprep.subr.mxu0 0.0
      %1628 = vmatpush1.msra.mxu0 %v1595
      %1629 = vmatprep.subr.mxu0 0.0
      %1630 = vmatpush1.msra.mxu0 %v1596
      %1631 = vmatprep.subr.mxu0 0.0
      %1632 = vmatpush1.msra.mxu0 %v1597
      %1633 = vmatprep.subr.mxu0 0.0
      %1634 = vmatpush1.msra.mxu0 %v1598
      %1635 = vmatprep.subr.mxu0 0.0
      %1636 = vmatpush1.msra.mxu0 %v1599
      %1637 = vmatprep.subr.mxu0 0.0
      %1638 = vmatpush1.msra.mxu0 %v1600
      %1639 = vmatprep.subr.mxu0 0.0
      %1640 = vmatpush1.msra.mxu0 %v1603
      %1641 = vmatprep.subr.mxu0 0.0
      %1642 = vmatpush1.msra.mxu0 0.0
      %1643 = vmatprep.subr.mxu0 0.0
      %1644 = vmatpush1.msra.mxu0 0.0
      %1645 = vmatprep.subr.mxu0 0.0
      %1646 = vmatpush1.msra.mxu0 0.0
      %1647 = vmatprep.subr.mxu0 0.0
      %1648 = vmatpush1.msra.mxu0 0.0
      %1649 = vmatprep.subr.mxu0 0.0
      %1650 = vmatpush1.msra.mxu0 0.0
      %1651 = vmatprep.subr.mxu0 0.0
      %1652 = vmatpush1.msra.mxu0 0.0
      %1653 = vmatprep.subr.mxu0 0.0
      %1654 = vmatpush1.msra.mxu0 0.0
      %1655 = vmatprep.subr.mxu0 0.0
      %1656 = vmatpush1.msra.mxu0 0.0
      %1657 = vmatprep.subr.mxu0 0.0
      %1658 = vmatpush1.msra.mxu0 0.0
      %1659 = vmatprep.subr.mxu0 0.0
      %1660 = vmatpush1.msra.mxu0 0.0
      %1661 = vmatprep.subr.mxu0 0.0
      %1662 = vmatpush1.msra.mxu0 0.0
      %1663 = vmatprep.subr.mxu0 0.0
      %1664 = vmatpush1.msra.mxu0 0.0
      %1665 = vmatprep.subr.mxu0 0.0
      %1666 = vmatpush1.msra.mxu0 0.0
      %1667 = vmatprep.subr.mxu0 0.0
      %1668 = vmatpush1.msra.mxu0 0.0
      %1669 = vmatprep.mubr.f32.mxu0 %v1484
      %1670 = vmatmul.mubr.f32.gmra.mrb[0].mxu0 %v1457
      %v1671 = vpop.f32.mrb[0].mxu0
      %v1672 = vadd.f32 0.0, %v1671
      %v1673 = vpop.f32.mrb[0].mxu0
      %1674 = vmatprep.mubr.f32.mxu0 %v1487
      %1675 = vmatmul.mubr.f32.gmra.mrb[0].mxu0 %v1459
      %v1676 = vpop.f32.mrb[0].mxu0
      %v1677 = vadd.f32 0.0, %v1676
      %v1678 = vpop.f32.mrb[0].mxu0
      %1679 = vmatprep.mubr.f32.mxu0 %v1490
      %1680 = vmatmul.mubr.f32.gmra.mrb[0].mxu0 %v1461
      %v1681 = vpop.f32.mrb[0].mxu0
      %v1682 = vadd.f32 0.0, %v1681
      %v1683 = vpop.f32.mrb[0].mxu0
      %1684 = vmatprep.mubr.f32.mxu0 %v1493
      %1685 = vmatmul.mubr.f32.gmra.mrb[0].mxu0 %v1463
      %v1686 = vpop.f32.mrb[0].mxu0
      %v1687 = vadd.f32 0.0, %v1686
      %v1688 = vpop.f32.mrb[0].mxu0
      %1689 = vdwg.mxu0
      %v1690 = vmax.f32 %v1565, %v1672
      %v1691 = vmax.f32 %v1570, %v1677
      %v1692 = vmax.f32 %v1575, %v1682
      %v1693 = vmax.f32 %v1580, %v1687
      %v1694 = vld [vmem:[%s7] sm:$0xff]
      %v1695 = vld [vmem:[%s7 + $0x8] sm:$0xff]
      %v1696 = vld [vmem:[%s7 + $0x10] sm:$0xff]
      %v1697 = vld [vmem:[%s7 + $0x18] sm:$0xff]
      %v1698 = vld [vmem:[%s7 + $0x20] sm:$0xff]
      %v1699 = vld [vmem:[%s7 + $0x28] sm:$0xff]
      %v1700 = vld [vmem:[%s7 + $0x30] sm:$0xff]
      %v1701 = vld [vmem:[%s7 + $0x38] sm:$0xff]
      %v1702 = vld [vmem:[%s7 + $0x40] sm:$0x3f]
      %s1703 = scalar_lea.vmem %s7, 72
      %v1704 = vld [vmem:[%s1703] sm:$0xff]
      %v1705 = vld [vmem:[%s1703 + $0x8] sm:$0xff]
      %v1706 = vld [vmem:[%s1703 + $0x10] sm:$0xff]
      %v1707 = vld [vmem:[%s1703 + $0x18] sm:$0xff]
      %v1708 = vld [vmem:[%s1703 + $0x20] sm:$0xff]
      %v1709 = vld [vmem:[%s1703 + $0x28] sm:$0xff]
      %v1710 = vld [vmem:[%s1703 + $0x30] sm:$0xff]
      %v1711 = vld [vmem:[%s1703 + $0x38] sm:$0xff]
      %v1712 = vld [vmem:[%s1703 + $0x40] sm:$0x3f]
      %vm1717 = vcmask 1046528
      %v1718 = vrot.slane %v1690, 1
      %v1719 = vrot.slane %v1691, 1
      %v1720 = vsel %vm1717, %v1718, %v1719
      %v1721 = vrot.slane %v1692, 1
      %v1722 = vsel %vm1717, %v1719, %v1721
      %v1723 = vrot.slane %v1693, 1
      %v1724 = vsel %vm1717, %v1721, %v1723
      %vm1725 = vcmask 572416
      %v1726 = vsel %vm1725, %v1720, 0
      %v1728 = vsel %vm1725, %v1722, 0
      %v1730 = vsel %vm1725, %v1724, 0
      %v1732 = vsel %vm1725, %v1723, 0
      %v1735 = vsel %vm1255, %v1712, 0
      %1737 = vmatprep.subr.mxu0 0.0
      %1738 = vmatpush1.msra.mxu0 %v1704
      %1739 = vmatprep.subr.mxu0 0.0
      %1740 = vmatpush1.msra.mxu0 %v1705
      %1741 = vmatprep.subr.mxu0 0.0
      %1742 = vmatpush1.msra.mxu0 %v1706
      %1743 = vmatprep.subr.mxu0 0.0
      %1744 = vmatpush1.msra.mxu0 %v1707
      %1745 = vmatprep.subr.mxu0 0.0
      %1746 = vmatpush1.msra.mxu0 %v1708
      %1747 = vmatprep.subr.mxu0 0.0
      %1748 = vmatpush1.msra.mxu0 %v1709
      %1749 = vmatprep.subr.mxu0 0.0
      %1750 = vmatpush1.msra.mxu0 %v1710
      %1751 = vmatprep.subr.mxu0 0.0
      %1752 = vmatpush1.msra.mxu0 %v1711
      %1753 = vmatprep.subr.mxu0 0.0
      %1754 = vmatpush1.msra.mxu0 %v1735
      %1755 = vmatprep.subr.mxu0 0.0
      %1756 = vmatpush1.msra.mxu0 0.0
      %1757 = vmatprep.subr.mxu0 0.0
      %1758 = vmatpush1.msra.mxu0 0.0
      %1759 = vmatprep.subr.mxu0 0.0
      %1760 = vmatpush1.msra.mxu0 0.0
      %1761 = vmatprep.subr.mxu0 0.0
      %1762 = vmatpush1.msra.mxu0 0.0
      %1763 = vmatprep.subr.mxu0 0.0
      %1764 = vmatpush1.msra.mxu0 0.0
      %1765 = vmatprep.subr.mxu0 0.0
      %1766 = vmatpush1.msra.mxu0 0.0
      %1767 = vmatprep.subr.mxu0 0.0
      %1768 = vmatpush1.msra.mxu0 0.0
      %1769 = vmatprep.subr.mxu0 0.0
      %1770 = vmatpush1.msra.mxu0 0.0
      %1771 = vmatprep.subr.mxu0 0.0
      %1772 = vmatpush1.msra.mxu0 0.0
      %1773 = vmatprep.subr.mxu0 0.0
      %1774 = vmatpush1.msra.mxu0 0.0
      %1775 = vmatprep.subr.mxu0 0.0
      %1776 = vmatpush1.msra.mxu0 0.0
      %1777 = vmatprep.subr.mxu0 0.0
      %1778 = vmatpush1.msra.mxu0 0.0
      %1779 = vmatprep.subr.mxu0 0.0
      %1780 = vmatpush1.msra.mxu0 0.0
      %1781 = vmatprep.subr.mxu0 0.0
      %1782 = vmatpush1.msra.mxu0 0.0
      %1783 = vmatprep.subr.mxu0 0.0
      %1784 = vmatpush1.msra.mxu0 0.0
      %1785 = vmatprep.subr.mxu0 0.0
      %1786 = vmatpush1.msra.mxu0 0.0
      %1787 = vmatprep.subr.mxu0 0.0
      %1788 = vmatpush1.msra.mxu0 0.0
      %1789 = vmatprep.subr.mxu0 0.0
      %1790 = vmatpush1.msra.mxu0 0.0
      %1791 = vmatprep.subr.mxu0 0.0
      %1792 = vmatpush1.msra.mxu0 0.0
      %1793 = vmatprep.subr.mxu0 0.0
      %1794 = vmatpush1.msra.mxu0 0.0
      %1795 = vmatprep.subr.mxu0 0.0
      %1796 = vmatpush1.msra.mxu0 0.0
      %1797 = vmatprep.subr.mxu0 0.0
      %1798 = vmatpush1.msra.mxu0 0.0
      %1799 = vmatprep.subr.mxu0 0.0
      %1800 = vmatpush1.msra.mxu0 0.0
      %1801 = vmatprep.mubr.f32.mxu0 0.0
      %1802 = vmatmul.mubr.f32.gmra.mrb[0].mxu0 %v1726
      %v1803 = vpop.f32.mrb[0].mxu0
      %v1804 = vadd.f32 0.0, %v1803
      %v1805 = vpop.f32.mrb[0].mxu0
      %1806 = vmatprep.mubr.f32.mxu0 0.0
      %1807 = vmatmul.mubr.f32.gmra.mrb[0].mxu0 %v1728
      %v1808 = vpop.f32.mrb[0].mxu0
      %v1809 = vadd.f32 0.0, %v1808
      %v1810 = vpop.f32.mrb[0].mxu0
      %1811 = vmatprep.mubr.f32.mxu0 0.0
      %1812 = vmatmul.mubr.f32.gmra.mrb[0].mxu0 %v1730
      %v1813 = vpop.f32.mrb[0].mxu0
      %v1814 = vadd.f32 0.0, %v1813
      %v1815 = vpop.f32.mrb[0].mxu0
      %1816 = vmatprep.mubr.f32.mxu0 0.0
      %1817 = vmatmul.mubr.f32.gmra.mrb[0].mxu0 %v1732
      %v1818 = vpop.f32.mrb[0].mxu0
      %v1819 = vadd.f32 0.0, %v1818
      %v1820 = vpop.f32.mrb[0].mxu0
      %1821 = vdwg.mxu0
      %v1822 = vsel %vm1725, %v1690, 0
      %v1824 = vsel %vm1725, %v1691, 0
      %v1826 = vsel %vm1725, %v1692, 0
      %v1828 = vsel %vm1725, %v1693, 0
      %v1831 = vsel %vm1255, %v1702, 0
      %1833 = vmatprep.subr.mxu0 0.0
      %1834 = vmatpush1.msra.mxu0 %v1694
      %1835 = vmatprep.subr.mxu0 0.0
      %1836 = vmatpush1.msra.mxu0 %v1695
      %1837 = vmatprep.subr.mxu0 0.0
      %1838 = vmatpush1.msra.mxu0 %v1696
      %1839 = vmatprep.subr.mxu0 0.0
      %1840 = vmatpush1.msra.mxu0 %v1697
      %1841 = vmatprep.subr.mxu0 0.0
      %1842 = vmatpush1.msra.mxu0 %v1698
      %1843 = vmatprep.subr.mxu0 0.0
      %1844 = vmatpush1.msra.mxu0 %v1699
      %1845 = vmatprep.subr.mxu0 0.0
      %1846 = vmatpush1.msra.mxu0 %v1700
      %1847 = vmatprep.subr.mxu0 0.0
      %1848 = vmatpush1.msra.mxu0 %v1701
      %1849 = vmatprep.subr.mxu0 0.0
      %1850 = vmatpush1.msra.mxu0 %v1831
      %1851 = vmatprep.subr.mxu0 0.0
      %1852 = vmatpush1.msra.mxu0 0.0
      %1853 = vmatprep.subr.mxu0 0.0
      %1854 = vmatpush1.msra.mxu0 0.0
      %1855 = vmatprep.subr.mxu0 0.0
      %1856 = vmatpush1.msra.mxu0 0.0
      %1857 = vmatprep.subr.mxu0 0.0
      %1858 = vmatpush1.msra.mxu0 0.0
      %1859 = vmatprep.subr.mxu0 0.0
      %1860 = vmatpush1.msra.mxu0 0.0
      %1861 = vmatprep.subr.mxu0 0.0
      %1862 = vmatpush1.msra.mxu0 0.0
      %1863 = vmatprep.subr.mxu0 0.0
      %1864 = vmatpush1.msra.mxu0 0.0
      %1865 = vmatprep.subr.mxu0 0.0
      %1866 = vmatpush1.msra.mxu0 0.0
      %1867 = vmatprep.subr.mxu0 0.0
      %1868 = vmatpush1.msra.mxu0 0.0
      %1869 = vmatprep.subr.mxu0 0.0
      %1870 = vmatpush1.msra.mxu0 0.0
      %1871 = vmatprep.subr.mxu0 0.0
      %1872 = vmatpush1.msra.mxu0 0.0
      %1873 = vmatprep.subr.mxu0 0.0
      %1874 = vmatpush1.msra.mxu0 0.0
      %1875 = vmatprep.subr.mxu0 0.0
      %1876 = vmatpush1.msra.mxu0 0.0
      %1877 = vmatprep.subr.mxu0 0.0
      %1878 = vmatpush1.msra.mxu0 0.0
      %1879 = vmatprep.subr.mxu0 0.0
      %1880 = vmatpush1.msra.mxu0 0.0
      %1881 = vmatprep.subr.mxu0 0.0
      %1882 = vmatpush1.msra.mxu0 0.0
      %1883 = vmatprep.subr.mxu0 0.0
      %1884 = vmatpush1.msra.mxu0 0.0
      %1885 = vmatprep.subr.mxu0 0.0
      %1886 = vmatpush1.msra.mxu0 0.0
      %1887 = vmatprep.subr.mxu0 0.0
      %1888 = vmatpush1.msra.mxu0 0.0
      %1889 = vmatprep.subr.mxu0 0.0
      %1890 = vmatpush1.msra.mxu0 0.0
      %1891 = vmatprep.subr.mxu0 0.0
      %1892 = vmatpush1.msra.mxu0 0.0
      %1893 = vmatprep.subr.mxu0 0.0
      %1894 = vmatpush1.msra.mxu0 0.0
      %1895 = vmatprep.subr.mxu0 0.0
      %1896 = vmatpush1.msra.mxu0 0.0
      %1897 = vmatprep.mubr.f32.mxu0 0.0
      %1898 = vmatmul.mubr.f32.gmra.mrb[0].mxu0 %v1822
      %v1899 = vpop.f32.mrb[0].mxu0
      %v1900 = vadd.f32 %v1804, %v1899
      %v1901 = vpop.f32.mrb[0].mxu0
      %1902 = vmatprep.mubr.f32.mxu0 0.0
      %1903 = vmatmul.mubr.f32.gmra.mrb[0].mxu0 %v1824
      %v1904 = vpop.f32.mrb[0].mxu0
      %v1905 = vadd.f32 %v1809, %v1904
      %v1906 = vpop.f32.mrb[0].mxu0
      %1907 = vmatprep.mubr.f32.mxu0 0.0
      %1908 = vmatmul.mubr.f32.gmra.mrb[0].mxu0 %v1826
      %v1909 = vpop.f32.mrb[0].mxu0
      %v1910 = vadd.f32 %v1814, %v1909
      %v1911 = vpop.f32.mrb[0].mxu0
      %1912 = vmatprep.mubr.f32.mxu0 0.0
      %1913 = vmatmul.mubr.f32.gmra.mrb[0].mxu0 %v1828
      %v1914 = vpop.f32.mrb[0].mxu0
      %v1915 = vadd.f32 %v1819, %v1914
      %v1916 = vpop.f32.mrb[0].mxu0
      %1917 = vdwg.mxu0
      %s1918 = scalar_lea.vmem %s7, 144
      %v1919 = vld [vmem:[%s1918] sm:$0xff]
      %v1920 = vld [vmem:[%s1918 + $0x8] sm:$0xff]
      %v1921 = vld [vmem:[%s1918 + $0x10] sm:$0xff]
      %v1922 = vld [vmem:[%s1918 + $0x18] sm:$0xff]
      %v1923 = vld [vmem:[%s1918 + $0x20] sm:$0xff]
      %v1924 = vld [vmem:[%s1918 + $0x28] sm:$0xff]
      %v1925 = vld [vmem:[%s1918 + $0x30] sm:$0xff]
      %v1926 = vld [vmem:[%s1918 + $0x38] sm:$0xff]
      %v1927 = vld [vmem:[%s1918 + $0x40] sm:$0x3f]
      %v1928 = vrot.slane %v1690, 2
      %v1929 = vrot.slane %v1691, 2
      %v1930 = vsel %vm1255, %v1928, %v1929
      %v1931 = vrot.slane %v1692, 2
      %v1932 = vsel %vm1255, %v1929, %v1931
      %v1933 = vrot.slane %v1693, 2
      %v1934 = vsel %vm1255, %v1931, %v1933
      %v1935 = vsel %vm1725, %v1930, 0
      %v1937 = vsel %vm1725, %v1932, 0
      %v1939 = vsel %vm1725, %v1934, 0
      %v1941 = vsel %vm1725, %v1933, 0
      %v1944 = vsel %vm1255, %v1927, 0
      %1946 = vmatprep.subr.mxu0 0.0
      %1947 = vmatpush1.msra.mxu0 %v1919
      %1948 = vmatprep.subr.mxu0 0.0
      %1949 = vmatpush1.msra.mxu0 %v1920
      %1950 = vmatprep.subr.mxu0 0.0
      %1951 = vmatpush1.msra.mxu0 %v1921
      %1952 = vmatprep.subr.mxu0 0.0
      %1953 = vmatpush1.msra.mxu0 %v1922
      %1954 = vmatprep.subr.mxu0 0.0
      %1955 = vmatpush1.msra.mxu0 %v1923
      %1956 = vmatprep.subr.mxu0 0.0
      %1957 = vmatpush1.msra.mxu0 %v1924
      %1958 = vmatprep.subr.mxu0 0.0
      %1959 = vmatpush1.msra.mxu0 %v1925
      %1960 = vmatprep.subr.mxu0 0.0
      %1961 = vmatpush1.msra.mxu0 %v1926
      %1962 = vmatprep.subr.mxu0 0.0
      %1963 = vmatpush1.msra.mxu0 %v1944
      %1964 = vmatprep.subr.mxu0 0.0
      %1965 = vmatpush1.msra.mxu0 0.0
      %1966 = vmatprep.subr.mxu0 0.0
      %1967 = vmatpush1.msra.mxu0 0.0
      %1968 = vmatprep.subr.mxu0 0.0
      %1969 = vmatpush1.msra.mxu0 0.0
      %1970 = vmatprep.subr.mxu0 0.0
      %1971 = vmatpush1.msra.mxu0 0.0
      %1972 = vmatprep.subr.mxu0 0.0
      %1973 = vmatpush1.msra.mxu0 0.0
      %1974 = vmatprep.subr.mxu0 0.0
      %1975 = vmatpush1.msra.mxu0 0.0
      %1976 = vmatprep.subr.mxu0 0.0
      %1977 = vmatpush1.msra.mxu0 0.0
      %1978 = vmatprep.subr.mxu0 0.0
      %1979 = vmatpush1.msra.mxu0 0.0
      %1980 = vmatprep.subr.mxu0 0.0
      %1981 = vmatpush1.msra.mxu0 0.0
      %1982 = vmatprep.subr.mxu0 0.0
      %1983 = vmatpush1.msra.mxu0 0.0
      %1984 = vmatprep.subr.mxu0 0.0
      %1985 = vmatpush1.msra.mxu0 0.0
      %1986 = vmatprep.subr.mxu0 0.0
      %1987 = vmatpush1.msra.mxu0 0.0
      %1988 = vmatprep.subr.mxu0 0.0
      %1989 = vmatpush1.msra.mxu0 0.0
      %1990 = vmatprep.subr.mxu0 0.0
      %1991 = vmatpush1.msra.mxu0 0.0
      %1992 = vmatprep.subr.mxu0 0.0
      %1993 = vmatpush1.msra.mxu0 0.0
      %1994 = vmatprep.subr.mxu0 0.0
      %1995 = vmatpush1.msra.mxu0 0.0
      %1996 = vmatprep.subr.mxu0 0.0
      %1997 = vmatpush1.msra.mxu0 0.0
      %1998 = vmatprep.subr.mxu0 0.0
      %1999 = vmatpush1.msra.mxu0 0.0
      %2000 = vmatprep.subr.mxu0 0.0
      %2001 = vmatpush1.msra.mxu0 0.0
      %2002 = vmatprep.subr.mxu0 0.0
      %2003 = vmatpush1.msra.mxu0 0.0
      %2004 = vmatprep.subr.mxu0 0.0
      %2005 = vmatpush1.msra.mxu0 0.0
      %2006 = vmatprep.subr.mxu0 0.0
      %2007 = vmatpush1.msra.mxu0 0.0
      %2008 = vmatprep.subr.mxu0 0.0
      %2009 = vmatpush1.msra.mxu0 0.0
      %2010 = vmatprep.mubr.f32.mxu0 0.0
      %2011 = vmatmul.mubr.f32.gmra.mrb[0].mxu0 %v1935
      %v2012 = vpop.f32.mrb[0].mxu0
      %v2013 = vadd.f32 0.0, %v2012
      %v2014 = vpop.f32.mrb[0].mxu0
      %2015 = vmatprep.mubr.f32.mxu0 0.0
      %2016 = vmatmul.mubr.f32.gmra.mrb[0].mxu0 %v1937
      %v2017 = vpop.f32.mrb[0].mxu0
      %v2018 = vadd.f32 0.0, %v2017
      %v2019 = vpop.f32.mrb[0].mxu0
      %2020 = vmatprep.mubr.f32.mxu0 0.0
      %2021 = vmatmul.mubr.f32.gmra.mrb[0].mxu0 %v1939
      %v2022 = vpop.f32.mrb[0].mxu0
      %v2023 = vadd.f32 0.0, %v2022
      %v2024 = vpop.f32.mrb[0].mxu0
      %2025 = vmatprep.mubr.f32.mxu0 0.0
      %2026 = vmatmul.mubr.f32.gmra.mrb[0].mxu0 %v1941
      %v2027 = vpop.f32.mrb[0].mxu0
      %v2028 = vadd.f32 0.0, %v2027
      %v2029 = vpop.f32.mrb[0].mxu0
      %2030 = vdwg.mxu0
      %v2031 = vadd.f32 %v1900, %v2013
      %v2032 = vadd.f32 %v1905, %v2018
      %v2033 = vadd.f32 %v1910, %v2023
      %v2034 = vadd.f32 %v1915, %v2028
      %v2035 = vld [vmem:[%s8] sm:$0x1]
      %v2037 = vlaneseq
      %v2038 = vshrl.u32 %v2037, 7
      %v2039 = vsub.s32 0, %v2038
      %v2040 = vrot.slane %v2035, %v2039
      %v2042 = vadd.f32 %v2031, %v2040
      %v2043 = vadd.f32 %v2032, %v2040
      %v2044 = vadd.f32 %v2033, %v2040
      %v2045 = vadd.f32 %v2034, %v2040
      %v2046 = vmax.f32 %v2042, 0.0
      %v2047 = vmax.f32 %v2043, 0.0
      %v2048 = vmax.f32 %v2044, 0.0
      %v2049 = vmax.f32 %v2045, 0.0
      %v2050 = vld [vmem:[%s9] sm:$0xff]
      %v2051 = vld [vmem:[%s9 + $0x8] sm:$0xff]
      %v2052 = vld [vmem:[%s9 + $0x10] sm:$0xff]
      %v2053 = vld [vmem:[%s9 + $0x18] sm:$0xff]
      %v2054 = vld [vmem:[%s9 + $0x20] sm:$0xff]
      %v2055 = vld [vmem:[%s9 + $0x28] sm:$0xff]
      %v2056 = vld [vmem:[%s9 + $0x30] sm:$0x3]
      %v2057 = vld [vmem:[%s10] sm:$0x1]
      %v2059 = vlaneseq
      %v2060 = vshrl.u32 %v2059, 7
      %v2061 = vsub.s32 0, %v2060
      %v2062 = vrot.slane %v2057, %v2061
      %vm2064 = vcmask 408576
      %v2066 = vsel %vm2064, %v2046, 0
      %v2069 = vsel %vm2064, %v2047, 0
      %v2072 = vsel %vm2064, %v2048, 0
      %v2075 = vsel %vm2064, %v2049, 0
      %vm2077 = vcmask 1041408
      %v2079 = vsel %vm2077, %v2056, 0
      %2081 = vmatprep.subr.mxu0 0.0
      %2082 = vmatpush1.msra.mxu0 %v2050
      %2083 = vmatprep.subr.mxu0 0.0
      %2084 = vmatpush1.msra.mxu0 %v2051
      %2085 = vmatprep.subr.mxu0 0.0
      %2086 = vmatpush1.msra.mxu0 %v2052
      %2087 = vmatprep.subr.mxu0 0.0
      %2088 = vmatpush1.msra.mxu0 %v2053
      %2089 = vmatprep.subr.mxu0 0.0
      %2090 = vmatpush1.msra.mxu0 %v2054
      %2091 = vmatprep.subr.mxu0 0.0
      %2092 = vmatpush1.msra.mxu0 %v2055
      %2093 = vmatprep.subr.mxu0 0.0
      %2094 = vmatpush1.msra.mxu0 %v2079
      %2095 = vmatprep.subr.mxu0 0.0
      %2096 = vmatpush1.msra.mxu0 0.0
      %2097 = vmatprep.subr.mxu0 0.0
      %2098 = vmatpush1.msra.mxu0 0.0
      %2099 = vmatprep.subr.mxu0 0.0
      %2100 = vmatpush1.msra.mxu0 0.0
      %2101 = vmatprep.subr.mxu0 0.0
      %2102 = vmatpush1.msra.mxu0 0.0
      %2103 = vmatprep.subr.mxu0 0.0
      %2104 = vmatpush1.msra.mxu0 0.0
      %2105 = vmatprep.subr.mxu0 0.0
      %2106 = vmatpush1.msra.mxu0 0.0
      %2107 = vmatprep.subr.mxu0 0.0
      %2108 = vmatpush1.msra.mxu0 0.0
      %2109 = vmatprep.subr.mxu0 0.0
      %2110 = vmatpush1.msra.mxu0 0.0
      %2111 = vmatprep.subr.mxu0 0.0
      %2112 = vmatpush1.msra.mxu0 0.0
      %2113 = vmatprep.subr.mxu0 0.0
      %2114 = vmatpush1.msra.mxu0 0.0
      %2115 = vmatprep.subr.mxu0 0.0
      %2116 = vmatpush1.msra.mxu0 0.0
      %2117 = vmatprep.subr.mxu0 0.0
      %2118 = vmatpush1.msra.mxu0 0.0
      %2119 = vmatprep.subr.mxu0 0.0
      %2120 = vmatpush1.msra.mxu0 0.0
      %2121 = vmatprep.subr.mxu0 0.0
      %2122 = vmatpush1.msra.mxu0 0.0
      %2123 = vmatprep.subr.mxu0 0.0
      %2124 = vmatpush1.msra.mxu0 0.0
      %2125 = vmatprep.subr.mxu0 0.0
      %2126 = vmatpush1.msra.mxu0 0.0
      %2127 = vmatprep.subr.mxu0 0.0
      %2128 = vmatpush1.msra.mxu0 0.0
      %2129 = vmatprep.subr.mxu0 0.0
      %2130 = vmatpush1.msra.mxu0 0.0
      %2131 = vmatprep.subr.mxu0 0.0
      %2132 = vmatpush1.msra.mxu0 0.0
      %2133 = vmatprep.subr.mxu0 0.0
      %2134 = vmatpush1.msra.mxu0 0.0
      %2135 = vmatprep.subr.mxu0 0.0
      %2136 = vmatpush1.msra.mxu0 0.0
      %2137 = vmatprep.subr.mxu0 0.0
      %2138 = vmatpush1.msra.mxu0 0.0
      %2139 = vmatprep.subr.mxu0 0.0
      %2140 = vmatpush1.msra.mxu0 0.0
      %2141 = vmatprep.subr.mxu0 0.0
      %2142 = vmatpush1.msra.mxu0 0.0
      %2143 = vmatprep.subr.mxu0 0.0
      %2144 = vmatpush1.msra.mxu0 0.0
      %2145 = vmatprep.mubr.f32.mxu0 0.0
      %2146 = vmatmul.mubr.f32.gmra.mrb[0].mxu0 %v2066
      %v2147 = vpop.f32.mrb[0].mxu0
      %v2148 = vadd.f32 %v2062, %v2147
      %v2149 = vpop.f32.mrb[0].mxu0
      %2150 = vmatprep.mubr.f32.mxu0 0.0
      %2151 = vmatmul.mubr.f32.gmra.mrb[0].mxu0 %v2069
      %v2152 = vpop.f32.mrb[0].mxu0
      %v2153 = vadd.f32 %v2062, %v2152
      %v2154 = vpop.f32.mrb[0].mxu0
      %2155 = vmatprep.mubr.f32.mxu0 0.0
      %2156 = vmatmul.mubr.f32.gmra.mrb[0].mxu0 %v2072
      %v2157 = vpop.f32.mrb[0].mxu0
      %v2158 = vadd.f32 %v2062, %v2157
      %v2159 = vpop.f32.mrb[0].mxu0
      %2160 = vmatprep.mubr.f32.mxu0 0.0
      %2161 = vmatmul.mubr.f32.gmra.mrb[0].mxu0 %v2075
      %v2162 = vpop.f32.mrb[0].mxu0
      %v2163 = vadd.f32 %v2062, %v2162
      %v2164 = vpop.f32.mrb[0].mxu0
      %2165 = vdwg.mxu0
      %v2166 = vmax.f32 %v2148, 0.0
      %v2167 = vmax.f32 %v2153, 0.0
      %v2168 = vmax.f32 %v2158, 0.0
      %v2169 = vmax.f32 %v2163, 0.0
      %v2170 = vld [vmem:[%s11] sm:$0xff]
      %v2171 = vld [vmem:[%s11 + $0x8] sm:$0xff]
      %vm2172 = vcmask 211968
      %v2174 = vsel %vm2172, %v2170, 0
      %v2177 = vsel %vm2172, %v2171, 0
      %v2180 = vsel %vm2077, %v2169, 0
      %2182 = vmatprep.subr.mxu0 0.0
      %2183 = vmatpush1.msra.mxu0 %v2166
      %2184 = vmatprep.subr.mxu0 0.0
      %2185 = vmatpush1.msra.mxu0 %v2167
      %2186 = vmatprep.subr.mxu0 0.0
      %2187 = vmatpush1.msra.mxu0 %v2168
      %2188 = vmatprep.subr.mxu0 0.0
      %2189 = vmatpush1.msra.mxu0 %v2180
      %2190 = vmatprep.subr.mxu0 0.0
      %2191 = vmatpush1.msra.mxu0 0.0
      %2192 = vmatprep.subr.mxu0 0.0
      %2193 = vmatpush1.msra.mxu0 0.0
      %2194 = vmatprep.subr.mxu0 0.0
      %2195 = vmatpush1.msra.mxu0 0.0
      %2196 = vmatprep.subr.mxu0 0.0
      %2197 = vmatpush1.msra.mxu0 0.0
      %2198 = vmatprep.subr.mxu0 0.0
      %2199 = vmatpush1.msra.mxu0 0.0
      %2200 = vmatprep.subr.mxu0 0.0
      %2201 = vmatpush1.msra.mxu0 0.0
      %2202 = vmatprep.subr.mxu0 0.0
      %2203 = vmatpush1.msra.mxu0 0.0
      %2204 = vmatprep.subr.mxu0 0.0
      %2205 = vmatpush1.msra.mxu0 0.0
      %2206 = vmatprep.subr.mxu0 0.0
      %2207 = vmatpush1.msra.mxu0 0.0
      %2208 = vmatprep.subr.mxu0 0.0
      %2209 = vmatpush1.msra.mxu0 0.0
      %2210 = vmatprep.subr.mxu0 0.0
      %2211 = vmatpush1.msra.mxu0 0.0
      %2212 = vmatprep.subr.mxu0 0.0
      %2213 = vmatpush1.msra.mxu0 0.0
      %2214 = vmatprep.subr.mxu0 0.0
      %2215 = vmatpush1.msra.mxu0 0.0
      %2216 = vmatprep.subr.mxu0 0.0
      %2217 = vmatpush1.msra.mxu0 0.0
      %2218 = vmatprep.subr.mxu0 0.0
      %2219 = vmatpush1.msra.mxu0 0.0
      %2220 = vmatprep.subr.mxu0 0.0
      %2221 = vmatpush1.msra.mxu0 0.0
      %2222 = vmatprep.subr.mxu0 0.0
      %2223 = vmatpush1.msra.mxu0 0.0
      %2224 = vmatprep.subr.mxu0 0.0
      %2225 = vmatpush1.msra.mxu0 0.0
      %2226 = vmatprep.subr.mxu0 0.0
      %2227 = vmatpush1.msra.mxu0 0.0
      %2228 = vmatprep.subr.mxu0 0.0
      %2229 = vmatpush1.msra.mxu0 0.0
      %2230 = vmatprep.subr.mxu0 0.0
      %2231 = vmatpush1.msra.mxu0 0.0
      %2232 = vmatprep.subr.mxu0 0.0
      %2233 = vmatpush1.msra.mxu0 0.0
      %2234 = vmatprep.subr.mxu0 0.0
      %2235 = vmatpush1.msra.mxu0 0.0
      %2236 = vmatprep.subr.mxu0 0.0
      %2237 = vmatpush1.msra.mxu0 0.0
      %2238 = vmatprep.subr.mxu0 0.0
      %2239 = vmatpush1.msra.mxu0 0.0
      %2240 = vmatprep.subr.mxu0 0.0
      %2241 = vmatpush1.msra.mxu0 0.0
      %2242 = vmatprep.subr.mxu0 0.0
      %2243 = vmatpush1.msra.mxu0 0.0
      %2244 = vmatprep.subr.mxu0 0.0
      %2245 = vmatpush1.msra.mxu0 0.0
      %2246 = vmatprep.mubr.f32.mxu0 0.0
      %2247 = vmatmul.mubr.f32.gmra.mrb[0].mxu0 %v2174
      %v2248 = vpop.f32.mrb[0].mxu0
      %v2249 = vadd.f32 0.0, %v2248
      %v2250 = vpop.f32.mrb[0].mxu0
      %2251 = vmatprep.mubr.f32.mxu0 0.0
      %2252 = vmatmul.mubr.f32.gmra.mrb[0].mxu0 %v2177
      %v2253 = vpop.f32.mrb[0].mxu0
      %v2254 = vadd.f32 0.0, %v2253
      %v2255 = vpop.f32.mrb[0].mxu0
      %2256 = vdwg.mxu0
      %s2257 = scalar_lea.vmem %s11, 16
      %v2258 = vld [vmem:[%s2257] sm:$0xff]
      %v2259 = vld [vmem:[%s2257 + $0x8] sm:$0xff]
      %v2261 = vsel %vm2172, %v2258, 0
      %v2264 = vsel %vm2172, %v2259, 0
      %2266 = vmatprep.subr.mxu0 0.0
      %2267 = vmatpush1.msra.mxu0 %v2166
      %2268 = vmatprep.subr.mxu0 0.0
      %2269 = vmatpush1.msra.mxu0 %v2167
      %2270 = vmatprep.subr.mxu0 0.0
      %2271 = vmatpush1.msra.mxu0 %v2168
      %2272 = vmatprep.subr.mxu0 0.0
      %2273 = vmatpush1.msra.mxu0 %v2180
      %2274 = vmatprep.subr.mxu0 0.0
      %2275 = vmatpush1.msra.mxu0 0.0
      %2276 = vmatprep.subr.mxu0 0.0
      %2277 = vmatpush1.msra.mxu0 0.0
      %2278 = vmatprep.subr.mxu0 0.0
      %2279 = vmatpush1.msra.mxu0 0.0
      %2280 = vmatprep.subr.mxu0 0.0
      %2281 = vmatpush1.msra.mxu0 0.0
      %2282 = vmatprep.subr.mxu0 0.0
      %2283 = vmatpush1.msra.mxu0 0.0
      %2284 = vmatprep.subr.mxu0 0.0
      %2285 = vmatpush1.msra.mxu0 0.0
      %2286 = vmatprep.subr.mxu0 0.0
      %2287 = vmatpush1.msra.mxu0 0.0
      %2288 = vmatprep.subr.mxu0 0.0
      %2289 = vmatpush1.msra.mxu0 0.0
      %2290 = vmatprep.subr.mxu0 0.0
      %2291 = vmatpush1.msra.mxu0 0.0
      %2292 = vmatprep.subr.mxu0 0.0
      %2293 = vmatpush1.msra.mxu0 0.0
      %2294 = vmatprep.subr.mxu0 0.0
      %2295 = vmatpush1.msra.mxu0 0.0
      %2296 = vmatprep.subr.mxu0 0.0
      %2297 = vmatpush1.msra.mxu0 0.0
      %2298 = vmatprep.subr.mxu0 0.0
      %2299 = vmatpush1.msra.mxu0 0.0
      %2300 = vmatprep.subr.mxu0 0.0
      %2301 = vmatpush1.msra.mxu0 0.0
      %2302 = vmatprep.subr.mxu0 0.0
      %2303 = vmatpush1.msra.mxu0 0.0
      %2304 = vmatprep.subr.mxu0 0.0
      %2305 = vmatpush1.msra.mxu0 0.0
      %2306 = vmatprep.subr.mxu0 0.0
      %2307 = vmatpush1.msra.mxu0 0.0
      %2308 = vmatprep.subr.mxu0 0.0
      %2309 = vmatpush1.msra.mxu0 0.0
      %2310 = vmatprep.subr.mxu0 0.0
      %2311 = vmatpush1.msra.mxu0 0.0
      %2312 = vmatprep.subr.mxu0 0.0
      %2313 = vmatpush1.msra.mxu0 0.0
      %2314 = vmatprep.subr.mxu0 0.0
      %2315 = vmatpush1.msra.mxu0 0.0
      %2316 = vmatprep.subr.mxu0 0.0
      %2317 = vmatpush1.msra.mxu0 0.0
      %2318 = vmatprep.subr.mxu0 0.0
      %2319 = vmatpush1.msra.mxu0 0.0
      %2320 = vmatprep.subr.mxu0 0.0
      %2321 = vmatpush1.msra.mxu0 0.0
      %2322 = vmatprep.subr.mxu0 0.0
      %2323 = vmatpush1.msra.mxu0 0.0
      %2324 = vmatprep.subr.mxu0 0.0
      %2325 = vmatpush1.msra.mxu0 0.0
      %2326 = vmatprep.subr.mxu0 0.0
      %2327 = vmatpush1.msra.mxu0 0.0
      %2328 = vmatprep.subr.mxu0 0.0
      %2329 = vmatpush1.msra.mxu0 0.0
      %2330 = vmatprep.mubr.f32.mxu0 0.0
      %2331 = vmatmul.mubr.f32.gmra.mrb[0].mxu0 %v2261
      %v2332 = vpop.f32.mrb[0].mxu0
      %v2333 = vadd.f32 0.0, %v2332
      %v2334 = vpop.f32.mrb[0].mxu0
      %2335 = vmatprep.mubr.f32.mxu0 0.0
      %2336 = vmatmul.mubr.f32.gmra.mrb[0].mxu0 %v2264
      %v2337 = vpop.f32.mrb[0].mxu0
      %v2338 = vadd.f32 0.0, %v2337
      %v2339 = vpop.f32.mrb[0].mxu0
      %2340 = vdwg.mxu0
      %v2341 = vmax.f32 %v2249, %v2333
      %v2342 = vmax.f32 %v2254, %v2338
      %v2343 = vld [vmem:[%s12] sm:$0xff]
      %v2344 = vld [vmem:[%s12 + $0x8] sm:$0xff]
      %v2345 = vld [vmem:[%s12 + $0x10] sm:$0xff]
      %v2346 = vld [vmem:[%s12 + $0x18] sm:$0xff]
      %v2347 = vld [vmem:[%s12 + $0x20] sm:$0xff]
      %v2348 = vld [vmem:[%s12 + $0x28] sm:$0xff]
      %v2349 = vld [vmem:[%s12 + $0x30] sm:$0x3]
      %v2351 = vsel %vm2064, %v2341, 0
      %v2354 = vsel %vm2064, %v2342, 0
      %v2357 = vsel %vm2077, %v2349, 0
      %2359 = vmatprep.subr.mxu0 0.0
      %2360 = vmatpush1.msra.mxu0 %v2343
      %2361 = vmatprep.subr.mxu0 0.0
      %2362 = vmatpush1.msra.mxu0 %v2344
      %2363 = vmatprep.subr.mxu0 0.0
      %2364 = vmatpush1.msra.mxu0 %v2345
      %2365 = vmatprep.subr.mxu0 0.0
      %2366 = vmatpush1.msra.mxu0 %v2346
      %2367 = vmatprep.subr.mxu0 0.0
      %2368 = vmatpush1.msra.mxu0 %v2347
      %2369 = vmatprep.subr.mxu0 0.0
      %2370 = vmatpush1.msra.mxu0 %v2348
      %2371 = vmatprep.subr.mxu0 0.0
      %2372 = vmatpush1.msra.mxu0 %v2357
      %2373 = vmatprep.subr.mxu0 0.0
      %2374 = vmatpush1.msra.mxu0 0.0
      %2375 = vmatprep.subr.mxu0 0.0
      %2376 = vmatpush1.msra.mxu0 0.0
      %2377 = vmatprep.subr.mxu0 0.0
      %2378 = vmatpush1.msra.mxu0 0.0
      %2379 = vmatprep.subr.mxu0 0.0
      %2380 = vmatpush1.msra.mxu0 0.0
      %2381 = vmatprep.subr.mxu0 0.0
      %2382 = vmatpush1.msra.mxu0 0.0
      %2383 = vmatprep.subr.mxu0 0.0
      %2384 = vmatpush1.msra.mxu0 0.0
      %2385 = vmatprep.subr.mxu0 0.0
      %2386 = vmatpush1.msra.mxu0 0.0
      %2387 = vmatprep.subr.mxu0 0.0
      %2388 = vmatpush1.msra.mxu0 0.0
      %2389 = vmatprep.subr.mxu0 0.0
      %2390 = vmatpush1.msra.mxu0 0.0
      %2391 = vmatprep.subr.mxu0 0.0
      %2392 = vmatpush1.msra.mxu0 0.0
      %2393 = vmatprep.subr.mxu0 0.0
      %2394 = vmatpush1.msra.mxu0 0.0
      %2395 = vmatprep.subr.mxu0 0.0
      %2396 = vmatpush1.msra.mxu0 0.0
      %2397 = vmatprep.subr.mxu0 0.0
      %2398 = vmatpush1.msra.mxu0 0.0
      %2399 = vmatprep.subr.mxu0 0.0
      %2400 = vmatpush1.msra.mxu0 0.0
      %2401 = vmatprep.subr.mxu0 0.0
      %2402 = vmatpush1.msra.mxu0 0.0
      %2403 = vmatprep.subr.mxu0 0.0
      %2404 = vmatpush1.msra.mxu0 0.0
      %2405 = vmatprep.subr.mxu0 0.0
      %2406 = vmatpush1.msra.mxu0 0.0
      %2407 = vmatprep.subr.mxu0 0.0
      %2408 = vmatpush1.msra.mxu0 0.0
      %2409 = vmatprep.subr.mxu0 0.0
      %2410 = vmatpush1.msra.mxu0 0.0
      %2411 = vmatprep.subr.mxu0 0.0
      %2412 = vmatpush1.msra.mxu0 0.0
      %2413 = vmatprep.subr.mxu0 0.0
      %2414 = vmatpush1.msra.mxu0 0.0
      %2415 = vmatprep.subr.mxu0 0.0
      %2416 = vmatpush1.msra.mxu0 0.0
      %2417 = vmatprep.subr.mxu0 0.0
      %2418 = vmatpush1.msra.mxu0 0.0
      %2419 = vmatprep.subr.mxu0 0.0
      %2420 = vmatpush1.msra.mxu0 0.0
      %2421 = vmatprep.subr.mxu0 0.0
      %2422 = vmatpush1.msra.mxu0 0.0
      %2423 = vmatprep.mubr.f32.mxu0 0.0
      %2424 = vmatmul.mubr.f32.gmra.mrb[0].mxu0 %v2351
      %v2425 = vpop.f32.mrb[0].mxu0
      %v2426 = vadd.f32 0.0, %v2425
      %v2427 = vpop.f32.mrb[0].mxu0
      %2428 = vmatprep.mubr.f32.mxu0 0.0
      %2429 = vmatmul.mubr.f32.gmra.mrb[0].mxu0 %v2354
      %v2430 = vpop.f32.mrb[0].mxu0
      %v2431 = vadd.f32 0.0, %v2430
      %v2432 = vpop.f32.mrb[0].mxu0
      %2433 = vdwg.mxu0
      %s2434 = scalar_lea.vmem %s12, 56
      %v2435 = vld [vmem:[%s2434] sm:$0xff]
      %v2436 = vld [vmem:[%s2434 + $0x8] sm:$0xff]
      %v2437 = vld [vmem:[%s2434 + $0x10] sm:$0xff]
      %v2438 = vld [vmem:[%s2434 + $0x18] sm:$0xff]
      %v2439 = vld [vmem:[%s2434 + $0x20] sm:$0xff]
      %v2440 = vld [vmem:[%s2434 + $0x28] sm:$0xff]
      %v2441 = vld [vmem:[%s2434 + $0x30] sm:$0x3]
      %v2443 = vsel %vm2077, %v2441, 0
      %2445 = vmatprep.subr.mxu0 0.0
      %2446 = vmatpush1.msra.mxu0 %v2435
      %2447 = vmatprep.subr.mxu0 0.0
      %2448 = vmatpush1.msra.mxu0 %v2436
      %2449 = vmatprep.subr.mxu0 0.0
      %2450 = vmatpush1.msra.mxu0 %v2437
      %2451 = vmatprep.subr.mxu0 0.0
      %2452 = vmatpush1.msra.mxu0 %v2438
      %2453 = vmatprep.subr.mxu0 0.0
      %2454 = vmatpush1.msra.mxu0 %v2439
      %2455 = vmatprep.subr.mxu0 0.0
      %2456 = vmatpush1.msra.mxu0 %v2440
      %2457 = vmatprep.subr.mxu0 0.0
      %2458 = vmatpush1.msra.mxu0 %v2443
      %2459 = vmatprep.subr.mxu0 0.0
      %2460 = vmatpush1.msra.mxu0 0.0
      %2461 = vmatprep.subr.mxu0 0.0
      %2462 = vmatpush1.msra.mxu0 0.0
      %2463 = vmatprep.subr.mxu0 0.0
      %2464 = vmatpush1.msra.mxu0 0.0
      %2465 = vmatprep.subr.mxu0 0.0
      %2466 = vmatpush1.msra.mxu0 0.0
      %2467 = vmatprep.subr.mxu0 0.0
      %2468 = vmatpush1.msra.mxu0 0.0
      %2469 = vmatprep.subr.mxu0 0.0
      %2470 = vmatpush1.msra.mxu0 0.0
      %2471 = vmatprep.subr.mxu0 0.0
      %2472 = vmatpush1.msra.mxu0 0.0
      %2473 = vmatprep.subr.mxu0 0.0
      %2474 = vmatpush1.msra.mxu0 0.0
      %2475 = vmatprep.subr.mxu0 0.0
      %2476 = vmatpush1.msra.mxu0 0.0
      %2477 = vmatprep.subr.mxu0 0.0
      %2478 = vmatpush1.msra.mxu0 0.0
      %2479 = vmatprep.subr.mxu0 0.0
      %2480 = vmatpush1.msra.mxu0 0.0
      %2481 = vmatprep.subr.mxu0 0.0
      %2482 = vmatpush1.msra.mxu0 0.0
      %2483 = vmatprep.subr.mxu0 0.0
      %2484 = vmatpush1.msra.mxu0 0.0
      %2485 = vmatprep.subr.mxu0 0.0
      %2486 = vmatpush1.msra.mxu0 0.0
      %2487 = vmatprep.subr.mxu0 0.0
      %2488 = vmatpush1.msra.mxu0 0.0
      %2489 = vmatprep.subr.mxu0 0.0
      %2490 = vmatpush1.msra.mxu0 0.0
      %2491 = vmatprep.subr.mxu0 0.0
      %2492 = vmatpush1.msra.mxu0 0.0
      %2493 = vmatprep.subr.mxu0 0.0
      %2494 = vmatpush1.msra.mxu0 0.0
      %2495 = vmatprep.subr.mxu0 0.0
      %2496 = vmatpush1.msra.mxu0 0.0
      %2497 = vmatprep.subr.mxu0 0.0
      %2498 = vmatpush1.msra.mxu0 0.0
      %2499 = vmatprep.subr.mxu0 0.0
      %2500 = vmatpush1.msra.mxu0 0.0
      %2501 = vmatprep.subr.mxu0 0.0
      %2502 = vmatpush1.msra.mxu0 0.0
      %2503 = vmatprep.subr.mxu0 0.0
      %2504 = vmatpush1.msra.mxu0 0.0
      %2505 = vmatprep.subr.mxu0 0.0
      %2506 = vmatpush1.msra.mxu0 0.0
      %2507 = vmatprep.subr.mxu0 0.0
      %2508 = vmatpush1.msra.mxu0 0.0
      %2509 = vmatprep.mubr.f32.mxu0 0.0
      %2510 = vmatmul.mubr.f32.gmra.mrb[0].mxu0 %v2351
      %v2511 = vpop.f32.mrb[0].mxu0
      %v2512 = vadd.f32 0.0, %v2511
      %v2513 = vpop.f32.mrb[0].mxu0
      %2514 = vmatprep.mubr.f32.mxu0 0.0
      %2515 = vmatmul.mubr.f32.gmra.mrb[0].mxu0 %v2354
      %v2516 = vpop.f32.mrb[0].mxu0
      %v2517 = vadd.f32 0.0, %v2516
      %v2518 = vpop.f32.mrb[0].mxu0
      %2519 = vdwg.mxu0
      %v2520 = vmax.f32 %v2426, %v2512
      %v2521 = vmax.f32 %v2431, %v2517
      %v2522 = vld [vmem:[%s14] sm:$0x1]
      %v2523 = vld [vmem:[%s13] sm:$0xff]
      %v2524 = vld [vmem:[%s13 + $0x8] sm:$0xff]
      %v2525 = vld [vmem:[%s13 + $0x10] sm:$0xf]
      %vm2526 = vcmask 162816
      %v2528 = vsel %vm2526, %v2520, 0
      %v2531 = vsel %vm1102, %v2525, 0
      %2533 = vmatprep.subr.mxu0 0.0
      %2534 = vmatpush1.msra.mxu0 %v2523
      %2535 = vmatprep.subr.mxu0 0.0
      %2536 = vmatpush1.msra.mxu0 %v2524
      %2537 = vmatprep.subr.mxu0 0.0
      %2538 = vmatpush1.msra.mxu0 %v2531
      %2539 = vmatprep.subr.mxu0 0.0
      %2540 = vmatpush1.msra.mxu0 0.0
      %2541 = vmatprep.subr.mxu0 0.0
      %2542 = vmatpush1.msra.mxu0 0.0
      %2543 = vmatprep.subr.mxu0 0.0
      %2544 = vmatpush1.msra.mxu0 0.0
      %2545 = vmatprep.subr.mxu0 0.0
      %2546 = vmatpush1.msra.mxu0 0.0
      %2547 = vmatprep.subr.mxu0 0.0
      %2548 = vmatpush1.msra.mxu0 0.0
      %2549 = vmatprep.subr.mxu0 0.0
      %2550 = vmatpush1.msra.mxu0 0.0
      %2551 = vmatprep.subr.mxu0 0.0
      %2552 = vmatpush1.msra.mxu0 0.0
      %2553 = vmatprep.subr.mxu0 0.0
      %2554 = vmatpush1.msra.mxu0 0.0
      %2555 = vmatprep.subr.mxu0 0.0
      %2556 = vmatpush1.msra.mxu0 0.0
      %2557 = vmatprep.subr.mxu0 0.0
      %2558 = vmatpush1.msra.mxu0 0.0
      %2559 = vmatprep.subr.mxu0 0.0
      %2560 = vmatpush1.msra.mxu0 0.0
      %2561 = vmatprep.subr.mxu0 0.0
      %2562 = vmatpush1.msra.mxu0 0.0
      %2563 = vmatprep.subr.mxu0 0.0
      %2564 = vmatpush1.msra.mxu0 0.0
      %2565 = vmatprep.subr.mxu0 0.0
      %2566 = vmatpush1.msra.mxu0 0.0
      %2567 = vmatprep.subr.mxu0 0.0
      %2568 = vmatpush1.msra.mxu0 0.0
      %2569 = vmatprep.subr.mxu0 0.0
      %2570 = vmatpush1.msra.mxu0 0.0
      %2571 = vmatprep.subr.mxu0 0.0
      %2572 = vmatpush1.msra.mxu0 0.0
      %2573 = vmatprep.subr.mxu0 0.0
      %2574 = vmatpush1.msra.mxu0 0.0
      %2575 = vmatprep.subr.mxu0 0.0
      %2576 = vmatpush1.msra.mxu0 0.0
      %2577 = vmatprep.subr.mxu0 0.0
      %2578 = vmatpush1.msra.mxu0 0.0
      %2579 = vmatprep.subr.mxu0 0.0
      %2580 = vmatpush1.msra.mxu0 0.0
      %2581 = vmatprep.subr.mxu0 0.0
      %2582 = vmatpush1.msra.mxu0 0.0
      %2583 = vmatprep.subr.mxu0 0.0
      %2584 = vmatpush1.msra.mxu0 0.0
      %2585 = vmatprep.subr.mxu0 0.0
      %2586 = vmatpush1.msra.mxu0 0.0
      %2587 = vmatprep.subr.mxu0 0.0
      %2588 = vmatpush1.msra.mxu0 0.0
      %2589 = vmatprep.subr.mxu0 0.0
      %2590 = vmatpush1.msra.mxu0 0.0
      %2591 = vmatprep.subr.mxu0 0.0
      %2592 = vmatpush1.msra.mxu0 0.0
      %2593 = vmatprep.subr.mxu0 0.0
      %2594 = vmatpush1.msra.mxu0 0.0
      %2595 = vmatprep.subr.mxu0 0.0
      %2596 = vmatpush1.msra.mxu0 0.0
      %2597 = vmatprep.mubr.f32.mxu0 0.0
      %2598 = vmatmul.mubr.f32.gmra.mrb[0].mxu0 %v2528
      %v2599 = vpop.f32.mrb[0].mxu0
      %v2600 = vadd.f32 0.0, %v2599
      %v2601 = vpop.f32.mrb[0].mxu0
      %2602 = vdwg.mxu0
      %v2604 = vlaneseq
      %v2605 = vshrl.u32 %v2604, 7
      %v2606 = vsub.s32 0, %v2605
      %v2607 = vrot.slane %v2522, %v2606
      %v2609 = vadd.f32 %v2607, %v2600
      %s2610 = scalar_lea.vmem %s13, 24
      %v2611 = vld [vmem:[%s2610] sm:$0xff]
      %v2612 = vld [vmem:[%s2610 + $0x8] sm:$0xff]
      %v2613 = vld [vmem:[%s2610 + $0x10] sm:$0xf]
      %v2615 = vsel %vm2526, %v2521, 0
      %v2618 = vsel %vm1102, %v2613, 0
      %2620 = vmatprep.subr.mxu0 0.0
      %2621 = vmatpush1.msra.mxu0 %v2611
      %2622 = vmatprep.subr.mxu0 0.0
      %2623 = vmatpush1.msra.mxu0 %v2612
      %2624 = vmatprep.subr.mxu0 0.0
      %2625 = vmatpush1.msra.mxu0 %v2618
      %2626 = vmatprep.subr.mxu0 0.0
      %2627 = vmatpush1.msra.mxu0 0.0
      %2628 = vmatprep.subr.mxu0 0.0
      %2629 = vmatpush1.msra.mxu0 0.0
      %2630 = vmatprep.subr.mxu0 0.0
      %2631 = vmatpush1.msra.mxu0 0.0
      %2632 = vmatprep.subr.mxu0 0.0
      %2633 = vmatpush1.msra.mxu0 0.0
      %2634 = vmatprep.subr.mxu0 0.0
      %2635 = vmatpush1.msra.mxu0 0.0
      %2636 = vmatprep.subr.mxu0 0.0
      %2637 = vmatpush1.msra.mxu0 0.0
      %2638 = vmatprep.subr.mxu0 0.0
      %2639 = vmatpush1.msra.mxu0 0.0
      %2640 = vmatprep.subr.mxu0 0.0
      %2641 = vmatpush1.msra.mxu0 0.0
      %2642 = vmatprep.subr.mxu0 0.0
      %2643 = vmatpush1.msra.mxu0 0.0
      %2644 = vmatprep.subr.mxu0 0.0
      %2645 = vmatpush1.msra.mxu0 0.0
      %2646 = vmatprep.subr.mxu0 0.0
      %2647 = vmatpush1.msra.mxu0 0.0
      %2648 = vmatprep.subr.mxu0 0.0
      %2649 = vmatpush1.msra.mxu0 0.0
      %2650 = vmatprep.subr.mxu0 0.0
      %2651 = vmatpush1.msra.mxu0 0.0
      %2652 = vmatprep.subr.mxu0 0.0
      %2653 = vmatpush1.msra.mxu0 0.0
      %2654 = vmatprep.subr.mxu0 0.0
      %2655 = vmatpush1.msra.mxu0 0.0
      %2656 = vmatprep.subr.mxu0 0.0
      %2657 = vmatpush1.msra.mxu0 0.0
      %2658 = vmatprep.subr.mxu0 0.0
      %2659 = vmatpush1.msra.mxu0 0.0
      %2660 = vmatprep.subr.mxu0 0.0
      %2661 = vmatpush1.msra.mxu0 0.0
      %2662 = vmatprep.subr.mxu0 0.0
      %2663 = vmatpush1.msra.mxu0 0.0
      %2664 = vmatprep.subr.mxu0 0.0
      %2665 = vmatpush1.msra.mxu0 0.0
      %2666 = vmatprep.subr.mxu0 0.0
      %2667 = vmatpush1.msra.mxu0 0.0
      %2668 = vmatprep.subr.mxu0 0.0
      %2669 = vmatpush1.msra.mxu0 0.0
      %2670 = vmatprep.subr.mxu0 0.0
      %2671 = vmatpush1.msra.mxu0 0.0
      %2672 = vmatprep.subr.mxu0 0.0
      %2673 = vmatpush1.msra.mxu0 0.0
      %2674 = vmatprep.subr.mxu0 0.0
      %2675 = vmatpush1.msra.mxu0 0.0
      %2676 = vmatprep.subr.mxu0 0.0
      %2677 = vmatpush1.msra.mxu0 0.0
      %2678 = vmatprep.subr.mxu0 0.0
      %2679 = vmatpush1.msra.mxu0 0.0
      %2680 = vmatprep.subr.mxu0 0.0
      %2681 = vmatpush1.msra.mxu0 0.0
      %2682 = vmatprep.subr.mxu0 0.0
      %2683 = vmatpush1.msra.mxu0 0.0
      %2684 = vmatprep.mubr.f32.mxu0 0.0
      %2685 = vmatmul.mubr.f32.gmra.mrb[0].mxu0 %v2615
      %v2686 = vpop.f32.mrb[0].mxu0
      %v2687 = vadd.f32 0.0, %v2686
      %v2688 = vpop.f32.mrb[0].mxu0
      %2689 = vdwg.mxu0
      %v2690 = vadd.f32 %v2609, %v2687
      %vm2691 = vcmask 19456
      %2692 = vst.msk [vmem:[%s494] sm:$0xf] %vm2691, %v2690
      %p2693 = scmp.lt.s32.totalorder %s26, 1
      %s2694 = scalar_select %p2693, %s26, 1
      %s2695 = smul.addr %s2694, 4
      %s2696 = scalar_lea.vmem %s15, %s2695
      // Predicated region
      $region81: #{food_model_forward.1} parent=79 // pred_check
        %p2697 = pneg %p364
      $region82: #{food_model_forward.1} parent=79 // pred_check_branch
        %2699 = sbr.rel (%p2697) target = $region84
      $region83: #{food_model_forward.1} parent=79 // pred_region
        _
      $region84: #{food_model_forward.1} parent=79 // pred_fallthru
        _
    $region80: #{food_model_forward.1} parent=5 // pred_fallthru
      _
    %p2700 = scmp.le.s32.totalorder 2, %s21
    // Predicated region
    $region85: #{food_model_forward.1} parent=5 // pred_check
      %p2701 = pneg %p2700
    $region86: #{food_model_forward.1} parent=5 // pred_check_branch
      %2703 = sbr.rel (%p2701) target = $region88
    $region87: #{food_model_forward.1} parent=5 // pred_region
      %s2704 = ssub.s32 %s21, 2
      // Predicated region
      $region89: #{food_model_forward.1} parent=87 // pred_check
        %p2705 = pneg %p370
      $region90: #{food_model_forward.1} parent=87 // pred_check_branch
        %2707 = sbr.rel (%p2705) target = $region92
      $region91: #{food_model_forward.1} parent=87 // pred_region
        %p2708 = scmp.lt.s32.totalorder %s27, 1
        %s2709 = scalar_select %p2708, %s27, 1
        %s2710 = smul.addr %s2709, 4
        %s2711 = scalar_lea.vmem %s15, %s2710
      $region92: #{food_model_forward.1} parent=87 // pred_fallthru
        _
    $region88: #{food_model_forward.1} parent=5 // pred_fallthru
      _
  $region6: #{food_model_forward.1} parent=0 // loop_footer
    %s25 = sadd.s32 1, %s21
  $region7: #{food_model_forward.1} parent=0 // loop_footer_branch
    %20 = sbr.rel target = $region3
  $region8: #{food_model_forward.1} parent=0 // loop_exit
    _

</llo_original>
